<compile_context>
chip_gen: v5e
topology: v5e:2x2
jax: 0.10.0
libtpu: 0.0.40
codegen_flags: <defaults>
</compile_context>

<pallas_src>
import functools
import math

import jax
import jax.numpy as jnp
from jax.experimental import pallas as pl
from jax.experimental.pallas import tpu as pltpu


# --------------------------------------------------------------------------- #
# small math helpers (in-kernel, fp32)
# --------------------------------------------------------------------------- #
def _layernorm(v, gamma, beta, eps=1e-5):
    mu = jnp.mean(v, axis=-1, keepdims=True)
    d = v - mu
    var = jnp.mean(d * d, axis=-1, keepdims=True)
    return d * jax.lax.rsqrt(var + eps) * gamma + beta


def _gelu_exact(v):
    # nn.GELU() default is the exact erf form.
    # TODO(synk): on v5e, the tanh-form GELU (EUP) halves VPU polynomial work if
    # tolerance allows; kept exact erf here for PyTorch parity.
    return 0.5 * v * (1.0 + jax.lax.erf(v * 0.7071067811865476))


# --------------------------------------------------------------------------- #
# fused kernel
# --------------------------------------------------------------------------- #
def block_kernel(x_ref, ctx_ref,
                 ln1_g_ref, ln1_b_ref,
                 wq_ref, wk_ref, wv_ref,
                 bq_ref, bk_ref, bv_ref,
                 wo_ref, bo_ref,
                 ln2_g_ref, ln2_b_ref,
                 w1_ref, b1_ref, w2_ref, b2_ref,
                 o_ref, attn_ref=None, *, num_heads):
    bf = jnp.bfloat16
    Bt, Tq, D = x_ref.shape
    Lk = ctx_ref.shape[1]
    H = num_heads
    hd = D // H
    rows_q = Bt * Tq
    rows_k = Bt * Lk
    G = Bt * H

    # Flatten into row-slabs so LN / QKV / out-proj / FFN are large MXU matmuls.
    x = x_ref[...].astype(jnp.float32).reshape(rows_q, D)
    ctx = ctx_ref[...].astype(jnp.float32).reshape(rows_k, D)

    # ---- norm1 (fp32) ----
    q_in = _layernorm(x, ln1_g_ref[...], ln1_b_ref[...])

    # ---- QKV projections: bf16 operands, fp32 accumulation; weights are (in, out) ----
    # 1/sqrt(hd) folded into Q once (one VPU pass over (rows, D)).
    Q = (jnp.dot(q_in.astype(bf), wq_ref[...], preferred_element_type=jnp.float32)
         + bq_ref[...]) * (1.0 / math.sqrt(hd))
    K = jnp.dot(ctx.astype(bf), wk_ref[...], preferred_element_type=jnp.float32) + bk_ref[...]
    V = jnp.dot(ctx.astype(bf), wv_ref[...], preferred_element_type=jnp.float32) + bv_ref[...]

    # ---- head split: one relayout per tensor, batched over (Bt*H) ----
    qh = Q.reshape(Bt, Tq, H, hd).transpose(0, 2, 1, 3).reshape(G, Tq, hd).astype(bf)
    kh = K.reshape(Bt, Lk, H, hd).transpose(0, 2, 1, 3).reshape(G, Lk, hd).astype(bf)
    vh = V.reshape(Bt, Lk, H, hd).transpose(0, 2, 1, 3).reshape(G, Lk, hd).astype(bf)

    # ---- attention core (one batched scores einsum / softmax / PV einsum) ----
    s = jnp.einsum('gqd,gkd->gqk', qh, kh, preferred_element_type=jnp.float32)
    s = s - jnp.max(s, axis=-1, keepdims=True)
    e = jnp.exp(s)
    inv = 1.0 / jnp.sum(e, axis=-1, keepdims=True)     # exact (PyTorch parity)
    p = e * inv                                         # (G, Tq, Lk) fp32

    if attn_ref is not None:
        # head-averaged attention weights (average_attn_weights=True)
        p_avg = jnp.mean(p.reshape(Bt, H, Tq, Lk), axis=1)      # (Bt, Tq, Lk)
        lk_pad = attn_ref.shape[-1]
        if lk_pad != Lk:
            # pad the lane dim so the HBM store is an unmasked full-lane vst
            p_avg = jnp.concatenate(
                [p_avg, jnp.zeros((Bt, Tq, lk_pad - Lk), jnp.float32)], axis=-1)
        attn_ref[...] = p_avg.astype(attn_ref.dtype)

    z = jnp.einsum('gqk,gkd->gqd', p.astype(bf), vh,
                   preferred_element_type=jnp.float32)           # (G, Tq, hd)
    # merge heads back -> (rows, D), then ONE k=D out-projection matmul
    z = z.reshape(Bt, H, Tq, hd).transpose(0, 2, 1, 3).reshape(rows_q, D)
    attn_out = jnp.dot(z.astype(bf), wo_ref[...],
                       preferred_element_type=jnp.float32) + bo_ref[...]

    # ---- residual 1 ----
    x2 = x + attn_out

    # ---- norm2 + K-blocked feed-forward ----
    h2 = _layernorm(x2, ln2_g_ref[...], ln2_b_ref[...]).astype(bf)
    nc = w1_ref.shape[0]            # number of hidden-dim chunks (static)

    def ff_body(c, acc):
        g = jnp.dot(h2, w1_ref[c], preferred_element_type=jnp.float32) + b1_ref[c]
        g = _gelu_exact(g)
        return acc + jnp.dot(g.astype(bf), w2_ref[c], preferred_element_type=jnp.float32)

    ff2 = jax.lax.fori_loop(0, nc, ff_body,
                            jnp.zeros((rows_q, D), jnp.float32), unroll=True)
    ff2 = ff2 + b2_ref[...]

    # ---- residual 2 ----
    o_ref[...] = (x2 + ff2).reshape(Bt, Tq, D).astype(o_ref.dtype)


# --------------------------------------------------------------------------- #
# tiling / VMEM planning
# --------------------------------------------------------------------------- #
def _round_up(x, m):
    return (x + m - 1) // m * m


def _vmem_plan():
    """(vmem_limit_bytes, per-step row cap) derived from physical VMEM."""
    try:
        cap = pltpu.get_tpu_info().vmem_capacity_bytes
    except Exception:
        cap = 64 * 1024 * 1024
    if cap >= 100 * 1024 * 1024:            # v5e / v6e: 128 MiB physical
        return 96 * 1024 * 1024, 2048
    return 56 * 1024 * 1024, 512            # v7x: 64 MiB physical


def _ff_chunk(hidden):
    """Largest multiple-of-128 divisor of the 4D hidden dim that is <= 2048."""
    if hidden <= 2048:
        return hidden
    for c in range(2048, 127, -128):
        if hidden % c == 0:
            return c
    return hidden


def _pick_block_b(B, Lq, row_cap):
    """Largest divisor of B keeping >= 2 grid steps and bt*Lq within the row cap."""
    if B <= 1:
        return 1
    best = 1
    for bt in range(1, B // 2 + 1):
        if B % bt == 0 and bt * Lq <= row_cap:
            best = bt
    return best


def _pick_block_q(B, bt, Lq, row_cap):
    """Query-tile size: split Lq only if needed to keep >= 2 parallel grid steps
    or to respect the per-step row cap (8-sublane constraint on the tile)."""
    if (B // bt) >= 2 and bt * Lq <= row_cap:
        return Lq
    best = Lq
    for tq in range(1, Lq):
        if Lq % tq != 0 or (Lq // tq) < 2 or bt * tq > row_cap:
            continue
        if tq % 8 != 0:
            continue
        best = tq
    return best


def _weight_spec(arr):
    """Full-array, grid-invariant spec; single-buffered (constant index_map, so
    multi-buffering buys nothing and would double the weight VMEM footprint)."""
    nd = arr.ndim
    idx = lambda i, j, _nd=nd: (0,) * _nd
    try:
        return pl.BlockSpec(arr.shape, idx, pipeline_mode=pl.Buffered(1))
    except TypeError:
        return pl.BlockSpec(arr.shape, idx)


# --------------------------------------------------------------------------- #
# one-time parameter packing (keep OUT of the per-step path)
# --------------------------------------------------------------------------- #
def pack_params(params):
    """Split the packed in_proj, transpose everything to (in, out), cast matmul
    weights to bf16 and pre-chunk the FFN weights over the 4D hidden dim.
    Call once and reuse the result; doing this per call would re-stream tens of
    MiB of weights through HBM on every invocation."""
    f32, bf = jnp.float32, jnp.bfloat16
    D = params["wo"].shape[0]
    hidden = params["w1"].shape[0]
    ffc = _ff_chunk(hidden)
    nc = hidden // ffc

    in_w = jnp.asarray(params["in_w"], f32)
    in_b = jnp.asarray(params["in_b"], f32).reshape(3 * D)
    return {
        "ln1_g": jnp.asarray(params["ln1_g"], f32).reshape(1, D),
        "ln1_b": jnp.asarray(params["ln1_b"], f32).reshape(1, D),
        "wq": in_w[0:D].T.astype(bf),
        "wk": in_w[D:2 * D].T.astype(bf),
        "wv": in_w[2 * D:3 * D].T.astype(bf),
        "bq": in_b[0:D].reshape(1, D),
        "bk": in_b[D:2 * D].reshape(1, D),
        "bv": in_b[2 * D:3 * D].reshape(1, D),
        "wo": jnp.asarray(params["wo"], f32).T.astype(bf),          # (D, D)
        "bo": jnp.asarray(params["bo"], f32).reshape(1, D),
        "ln2_g": jnp.asarray(params["ln2_g"], f32).reshape(1, D),
        "ln2_b": jnp.asarray(params["ln2_b"], f32).reshape(1, D),
        # FFN weights pre-chunked for in-kernel K-blocking:
        "w1": jnp.asarray(params["w1"], f32).T.reshape(D, nc, ffc)
                 .transpose(1, 0, 2).astype(bf),                    # (nc, D, ffc)
        "b1": jnp.asarray(params["b1"], f32).reshape(nc, 1, ffc),   # (nc, 1, ffc)
        "w2": jnp.asarray(params["w2"], f32).T.reshape(nc, ffc, D).astype(bf),
        "b2": jnp.asarray(params["b2"], f32).reshape(1, D),
    }


# --------------------------------------------------------------------------- #
# wrapper
# --------------------------------------------------------------------------- #
@functools.partial(jax.jit, static_argnames=("num_heads", "return_attn"))
def cross_attention_block(x, context, packed, num_heads, return_attn=True):
    B, Lq, D = x.shape
    _, Lk, _ = context.shape
    assert D % num_heads == 0

    vmem_limit, row_cap = _vmem_plan()
    bt = _pick_block_b(B, Lq, row_cap)
    tq = _pick_block_q(B, bt, Lq, row_cap)
    grid = (B // bt, Lq // tq)

    weight_names = ["ln1_g", "ln1_b", "wq", "wk", "wv", "bq", "bk", "bv",
                    "wo", "bo", "ln2_g", "ln2_b", "w1", "b1", "w2", "b2"]
    weights = [packed[k] for k in weight_names]

    in_specs = [
        pl.BlockSpec((bt, tq, D), lambda i, j: (i, j, 0)),   # x (query tile)
        pl.BlockSpec((bt, Lk, D), lambda i, j: (i, 0, 0)),   # context (full K/V)
    ] + [_weight_spec(w) for w in weights]

    out_specs = [pl.BlockSpec((bt, tq, D), lambda i, j: (i, j, 0))]
    out_shape = [jax.ShapeDtypeStruct((B, Lq, D), x.dtype)]
    lk_pad = Lk if Lk % 128 == 0 else _round_up(Lk, 128)
    if return_attn:
        out_specs.append(pl.BlockSpec((bt, tq, lk_pad), lambda i, j: (i, j, 0)))
        out_shape.append(jax.ShapeDtypeStruct((B, Lq, lk_pad), jnp.float32))

    kernel = functools.partial(block_kernel, num_heads=num_heads)

    outs = pl.pallas_call(
        kernel,
        grid=grid,
        in_specs=in_specs,
        out_specs=out_specs,
        out_shape=out_shape,
        compiler_params=pltpu.CompilerParams(
            dimension_semantics=("parallel", "parallel"),
            vmem_limit_bytes=vmem_limit,
        ),
    )(x, context, *weights)

    if return_attn:
        out, attn = outs
        return out, attn[..., :Lk]
    return outs[0]


# --------------------------------------------------------------------------- #
# pure-JAX reference (fp32) for parity checking
# --------------------------------------------------------------------------- #
def _reference(x, context, params, num_heads):
    B, Lq, D = x.shape
    Lk = context.shape[1]
    H = num_heads
    hd = D // H

    def ln(v, g, b):
        mu = v.mean(-1, keepdims=True)
        var = ((v - mu) ** 2).mean(-1, keepdims=True)
        return (v - mu) / jnp.sqrt(var + 1e-5) * g + b

    q = ln(x, params["ln1_g"], params["ln1_b"])
    in_w, in_b = params["in_w"], params["in_b"]
    Q = q @ in_w[:D].T + in_b[:D]
    K = context @ in_w[D:2 * D].T + in_b[D:2 * D]
    V = context @ in_w[2 * D:].T + in_b[2 * D:]
    Qh = Q.reshape(B, Lq, H, hd).transpose(0, 2, 1, 3)
    Kh = K.reshape(B, Lk, H, hd).transpose(0, 2, 1, 3)
    Vh = V.reshape(B, Lk, H, hd).transpose(0, 2, 1, 3)
    s = jnp.einsum('bhqd,bhkd->bhqk', Qh, Kh) / math.sqrt(hd)
    p = jax.nn.softmax(s, axis=-1)
    attn_w = p.mean(axis=1)
    z = jnp.einsum('bhqk,bhkd->bhqd', p, Vh).transpose(0, 2, 1, 3).reshape(B, Lq, D)
    attn_out = z @ params["wo"].T + params["bo"]
    x2 = x + attn_out
    h = ln(x2, params["ln2_g"], params["ln2_b"])
    ff = jax.nn.gelu(h @ params["w1"].T + params["b1"], approximate=False)
    ff = ff @ params["w2"].T + params["b2"]
    return x2 + ff, attn_w


# --------------------------------------------------------------------------- #
if __name__ == "__main__":
    B, Lq, Lk, D, H = 2, 8, 8, 32, 4

    key = jax.random.PRNGKey(0)
    ks = jax.random.split(key, 10)
    s = 0.05

    x = jax.random.normal(ks[0], (B, Lq, D), jnp.float32)
    context = jax.random.normal(ks[1], (B, Lk, D), jnp.float32)

    params = {
        # LayerNorm defaults: weight=1, bias=0
        "ln1_g": jnp.ones((D,), jnp.float32),
        "ln1_b": jnp.zeros((D,), jnp.float32),
        "ln2_g": jnp.ones((D,), jnp.float32),
        "ln2_b": jnp.zeros((D,), jnp.float32),
        # MultiheadAttention packed in-projection (3D, D) + bias (3D,)
        "in_w": jax.random.normal(ks[2], (3 * D, D), jnp.float32) * s,
        "in_b": jax.random.normal(ks[3], (3 * D,), jnp.float32) * s,
        # out_proj
        "wo": jax.random.normal(ks[4], (D, D), jnp.float32) * s,
        "bo": jax.random.normal(ks[5], (D,), jnp.float32) * s,
        # feed-forward: Linear(D, 4D) -> GELU -> Linear(4D, D)
        "w1": jax.random.normal(ks[6], (4 * D, D), jnp.float32) * s,
        "b1": jax.random.normal(ks[7], (4 * D,), jnp.float32) * s,
        "w2": jax.random.normal(ks[8], (D, 4 * D), jnp.float32) * s,
        "b2": jax.random.normal(ks[9], (D,), jnp.float32) * s,
    }

    packed = pack_params(params)   # one-time packing, outside the per-step path

    out, attn_w = cross_attention_block(x, context, packed, num_heads=H)
    jax.block_until_ready((out, attn_w))

    assert out.shape == (B, Lq, D)
    assert attn_w.shape == (B, Lq, Lk)
    assert bool(jnp.all(jnp.isfinite(out))) and bool(jnp.all(jnp.isfinite(attn_w)))

    # parity vs a pure-JAX fp32 reference (loose tolerance: bf16 matmul operands)
    ref_out, ref_attn = _reference(x, context, params, H)
    assert bool(jnp.allclose(out, ref_out, atol=3e-2, rtol=0))
    assert bool(jnp.allclose(attn_w, ref_attn, atol=2e-2, rtol=0))

    print("KERNEL_OK")
</pallas_src>

<mosaic_0001>
module attributes {stable_mosaic.version = 11 : i64} {
  func.func @block_kernel(%arg0: i32, %arg1: i32, %arg2: memref<1x8x32xf32, #tpu.memory_space<vmem>>, %arg3: memref<1x8x32xf32, #tpu.memory_space<vmem>>, %arg4: memref<1x32xf32, #tpu.memory_space<vmem>>, %arg5: memref<1x32xf32, #tpu.memory_space<vmem>>, %arg6: memref<32x32xbf16, #tpu.memory_space<vmem>>, %arg7: memref<32x32xbf16, #tpu.memory_space<vmem>>, %arg8: memref<32x32xbf16, #tpu.memory_space<vmem>>, %arg9: memref<1x32xf32, #tpu.memory_space<vmem>>, %arg10: memref<1x32xf32, #tpu.memory_space<vmem>>, %arg11: memref<1x32xf32, #tpu.memory_space<vmem>>, %arg12: memref<32x32xbf16, #tpu.memory_space<vmem>>, %arg13: memref<1x32xf32, #tpu.memory_space<vmem>>, %arg14: memref<1x32xf32, #tpu.memory_space<vmem>>, %arg15: memref<1x32xf32, #tpu.memory_space<vmem>>, %arg16: memref<1x32x128xbf16, #tpu.memory_space<vmem>>, %arg17: memref<1x1x128xf32, #tpu.memory_space<vmem>>, %arg18: memref<1x128x32xbf16, #tpu.memory_space<vmem>>, %arg19: memref<1x32xf32, #tpu.memory_space<vmem>>, %arg20: memref<1x8x32xf32, #tpu.memory_space<vmem>>, %arg21: memref<1x8x128xf32, #tpu.memory_space<vmem>>) attributes {dimension_semantics = [#tpu.dimension_semantics<parallel>, #tpu.dimension_semantics<parallel>], iteration_bounds = array<i64: 2, 1>, scalar_prefetch = 0 : i64, scratch_operands = 0 : i64, tpu.core_type = #tpu.core_type<tc>, window_params = [{transform_indices = @transform_0, window_bounds = array<i64: 1, 8, 32>}, {transform_indices = @transform_1, window_bounds = array<i64: 1, 8, 32>}, {pipeline_mode = #tpu.pipeline_mode<synchronous>, transform_indices = @transform_2, window_bounds = array<i64: 1, 32>}, {pipeline_mode = #tpu.pipeline_mode<synchronous>, transform_indices = @transform_3, window_bounds = array<i64: 1, 32>}, {pipeline_mode = #tpu.pipeline_mode<synchronous>, transform_indices = @transform_4, window_bounds = array<i64: 32, 32>}, {pipeline_mode = #tpu.pipeline_mode<synchronous>, transform_indices = @transform_5, window_bounds = array<i64: 32, 32>}, {pipeline_mode = #tpu.pipeline_mode<synchronous>, transform_indices = @transform_6, window_bounds = array<i64: 32, 32>}, {pipeline_mode = #tpu.pipeline_mode<synchronous>, transform_indices = @transform_7, window_bounds = array<i64: 1, 32>}, {pipeline_mode = #tpu.pipeline_mode<synchronous>, transform_indices = @transform_8, window_bounds = array<i64: 1, 32>}, {pipeline_mode = #tpu.pipeline_mode<synchronous>, transform_indices = @transform_9, window_bounds = array<i64: 1, 32>}, {pipeline_mode = #tpu.pipeline_mode<synchronous>, transform_indices = @transform_10, window_bounds = array<i64: 32, 32>}, {pipeline_mode = #tpu.pipeline_mode<synchronous>, transform_indices = @transform_11, window_bounds = array<i64: 1, 32>}, {pipeline_mode = #tpu.pipeline_mode<synchronous>, transform_indices = @transform_12, window_bounds = array<i64: 1, 32>}, {pipeline_mode = #tpu.pipeline_mode<synchronous>, transform_indices = @transform_13, window_bounds = array<i64: 1, 32>}, {pipeline_mode = #tpu.pipeline_mode<synchronous>, transform_indices = @transform_14, window_bounds = array<i64: 1, 32, 128>}, {pipeline_mode = #tpu.pipeline_mode<synchronous>, transform_indices = @transform_15, window_bounds = array<i64: 1, 1, 128>}, {pipeline_mode = #tpu.pipeline_mode<synchronous>, transform_indices = @transform_16, window_bounds = array<i64: 1, 128, 32>}, {pipeline_mode = #tpu.pipeline_mode<synchronous>, transform_indices = @transform_17, window_bounds = array<i64: 1, 32>}, {transform_indices = @transform_18, window_bounds = array<i64: 1, 8, 32>}, {transform_indices = @transform_19, window_bounds = array<i64: 1, 8, 128>}]} {
    %c0 = arith.constant 0 : index
    %c0_0 = arith.constant 0 : index
    %c0_1 = arith.constant 0 : index
    %0 = vector.load %arg2[%c0, %c0_0, %c0_1] : memref<1x8x32xf32, #tpu.memory_space<vmem>>, vector<1x8x32xf32>
    %1 = vector.shape_cast %0 : vector<1x8x32xf32> to vector<8x32xf32>
    %c0_2 = arith.constant 0 : index
    %c0_3 = arith.constant 0 : index
    %c0_4 = arith.constant 0 : index
    %2 = vector.load %arg3[%c0_2, %c0_3, %c0_4] : memref<1x8x32xf32, #tpu.memory_space<vmem>>, vector<1x8x32xf32>
    %3 = vector.shape_cast %2 : vector<1x8x32xf32> to vector<8x32xf32>
    %c0_5 = arith.constant 0 : index
    %c0_6 = arith.constant 0 : index
    %4 = vector.load %arg4[%c0_5, %c0_6] : memref<1x32xf32, #tpu.memory_space<vmem>>, vector<1x32xf32>
    %c0_7 = arith.constant 0 : index
    %c0_8 = arith.constant 0 : index
    %5 = vector.load %arg5[%c0_7, %c0_8] : memref<1x32xf32, #tpu.memory_space<vmem>>, vector<1x32xf32>
    %cst = arith.constant dense<0.000000e+00> : vector<8xf32>
    %6 = vector.multi_reduction <add>, %1, %cst [1] : vector<8x32xf32> to vector<8xf32>
    %7 = vector.shape_cast %6 : vector<8xf32> to vector<8x1xf32>
    %cst_9 = arith.constant 3.200000e+01 : f32
    %8 = vector.broadcast %cst_9 : f32 to vector<8x1xf32>
    %9 = arith.divf %7, %8 : vector<8x1xf32>
    %10 = vector.broadcast %9 : vector<8x1xf32> to vector<8x32xf32>
    %11 = arith.subf %1, %10 : vector<8x32xf32>
    %12 = arith.mulf %11, %11 : vector<8x32xf32>
    %cst_10 = arith.constant dense<0.000000e+00> : vector<8xf32>
    %13 = vector.multi_reduction <add>, %12, %cst_10 [1] : vector<8x32xf32> to vector<8xf32>
    %14 = vector.shape_cast %13 : vector<8xf32> to vector<8x1xf32>
    %cst_11 = arith.constant 3.200000e+01 : f32
    %15 = vector.broadcast %cst_11 : f32 to vector<8x1xf32>
    %16 = arith.divf %14, %15 : vector<8x1xf32>
    %cst_12 = arith.constant 9.99999974E-6 : f32
    %17 = vector.broadcast %cst_12 : f32 to vector<8x1xf32>
    %18 = arith.addf %16, %17 : vector<8x1xf32>
    %19 = math.rsqrt %18 : vector<8x1xf32>
    %20 = vector.broadcast %19 : vector<8x1xf32> to vector<8x32xf32>
    %21 = arith.mulf %11, %20 : vector<8x32xf32>
    %22 = vector.broadcast %4 : vector<1x32xf32> to vector<8x32xf32>
    %23 = arith.mulf %21, %22 : vector<8x32xf32>
    %24 = vector.broadcast %5 : vector<1x32xf32> to vector<8x32xf32>
    %25 = arith.addf %23, %24 : vector<8x32xf32>
    %26 = arith.truncf %25 : vector<8x32xf32> to vector<8x32xbf16>
    %c0_13 = arith.constant 0 : index
    %c0_14 = arith.constant 0 : index
    %27 = vector.load %arg6[%c0_13, %c0_14] : memref<32x32xbf16, #tpu.memory_space<vmem>>, vector<32x32xbf16>
    %cst_15 = arith.constant dense<0.000000e+00> : vector<8x32xf32>
    %28 = tpu.matmul %26, %27, %cst_15 {dimension_numbers = #tpu.dot_dimension_numbers<[1], [0], [0], [1], [0, 0, 1, 1], [], []>} : vector<8x32xbf16>, vector<32x32xbf16>, vector<8x32xf32> -> vector<8x32xf32>
    %c0_16 = arith.constant 0 : index
    %c0_17 = arith.constant 0 : index
    %29 = vector.load %arg9[%c0_16, %c0_17] : memref<1x32xf32, #tpu.memory_space<vmem>>, vector<1x32xf32>
    %30 = vector.broadcast %29 : vector<1x32xf32> to vector<8x32xf32>
    %31 = arith.addf %28, %30 : vector<8x32xf32>
    %cst_18 = arith.constant 0.353553385 : f32
    %32 = vector.broadcast %cst_18 : f32 to vector<8x32xf32>
    %33 = arith.mulf %31, %32 : vector<8x32xf32>
    %34 = arith.truncf %3 : vector<8x32xf32> to vector<8x32xbf16>
    %c0_19 = arith.constant 0 : index
    %c0_20 = arith.constant 0 : index
    %35 = vector.load %arg7[%c0_19, %c0_20] : memref<32x32xbf16, #tpu.memory_space<vmem>>, vector<32x32xbf16>
    %cst_21 = arith.constant dense<0.000000e+00> : vector<8x32xf32>
    %36 = tpu.matmul %34, %35, %cst_21 {dimension_numbers = #tpu.dot_dimension_numbers<[1], [0], [0], [1], [0, 0, 1, 1], [], []>} : vector<8x32xbf16>, vector<32x32xbf16>, vector<8x32xf32> -> vector<8x32xf32>
    %c0_22 = arith.constant 0 : index
    %c0_23 = arith.constant 0 : index
    %37 = vector.load %arg10[%c0_22, %c0_23] : memref<1x32xf32, #tpu.memory_space<vmem>>, vector<1x32xf32>
    %38 = vector.broadcast %37 : vector<1x32xf32> to vector<8x32xf32>
    %39 = arith.addf %36, %38 : vector<8x32xf32>
    %40 = arith.truncf %3 : vector<8x32xf32> to vector<8x32xbf16>
    %c0_24 = arith.constant 0 : index
    %c0_25 = arith.constant 0 : index
    %41 = vector.load %arg8[%c0_24, %c0_25] : memref<32x32xbf16, #tpu.memory_space<vmem>>, vector<32x32xbf16>
    %cst_26 = arith.constant dense<0.000000e+00> : vector<8x32xf32>
    %42 = tpu.matmul %40, %41, %cst_26 {dimension_numbers = #tpu.dot_dimension_numbers<[1], [0], [0], [1], [0, 0, 1, 1], [], []>} : vector<8x32xbf16>, vector<32x32xbf16>, vector<8x32xf32> -> vector<8x32xf32>
    %c0_27 = arith.constant 0 : index
    %c0_28 = arith.constant 0 : index
    %43 = vector.load %arg11[%c0_27, %c0_28] : memref<1x32xf32, #tpu.memory_space<vmem>>, vector<1x32xf32>
    %44 = vector.broadcast %43 : vector<1x32xf32> to vector<8x32xf32>
    %45 = arith.addf %42, %44 : vector<8x32xf32>
    %46 = vector.shape_cast %33 : vector<8x32xf32> to vector<1x8x4x8xf32>
    %47 = tpu.transpose %46, [0, 2, 1, 3] : vector<1x8x4x8xf32> -> vector<1x4x8x8xf32>
    %48 = vector.shape_cast %47 : vector<1x4x8x8xf32> to vector<4x8x8xf32>
    %49 = arith.truncf %48 : vector<4x8x8xf32> to vector<4x8x8xbf16>
    %50 = vector.shape_cast %39 : vector<8x32xf32> to vector<1x8x4x8xf32>
    %51 = tpu.transpose %50, [0, 2, 1, 3] : vector<1x8x4x8xf32> -> vector<1x4x8x8xf32>
    %52 = vector.shape_cast %51 : vector<1x4x8x8xf32> to vector<4x8x8xf32>
    %53 = arith.truncf %52 : vector<4x8x8xf32> to vector<4x8x8xbf16>
    %54 = vector.shape_cast %45 : vector<8x32xf32> to vector<1x8x4x8xf32>
    %55 = tpu.transpose %54, [0, 2, 1, 3] : vector<1x8x4x8xf32> -> vector<1x4x8x8xf32>
    %56 = vector.shape_cast %55 : vector<1x4x8x8xf32> to vector<4x8x8xf32>
    %57 = arith.truncf %56 : vector<4x8x8xf32> to vector<4x8x8xbf16>
    "tpu.trace_start"() <{level = 10 : i32, message = "gqd,gkd->gqk"}> : () -> ()
    %cst_29 = arith.constant dense<0.000000e+00> : vector<4x8x8xf32>
    %58 = tpu.matmul %49, %53, %cst_29 {dimension_numbers = #tpu.dot_dimension_numbers<[2], [2], [1], [1], [0, 0, 0, 1, 1, 1], [0], [0]>} : vector<4x8x8xbf16>, vector<4x8x8xbf16>, vector<4x8x8xf32> -> vector<4x8x8xf32>
    "tpu.trace_stop"() : () -> ()
    %cst_30 = arith.constant dense<0xFF800000> : vector<4x8xf32>
    %59 = vector.multi_reduction <maximumf>, %58, %cst_30 [2] : vector<4x8x8xf32> to vector<4x8xf32>
    %60 = vector.shape_cast %59 : vector<4x8xf32> to vector<4x8x1xf32>
    %61 = vector.broadcast %60 : vector<4x8x1xf32> to vector<4x8x8xf32>
    %62 = arith.subf %58, %61 : vector<4x8x8xf32>
    %63 = math.exp %62 : vector<4x8x8xf32>
    %cst_31 = arith.constant dense<0.000000e+00> : vector<4x8xf32>
    %64 = vector.multi_reduction <add>, %63, %cst_31 [2] : vector<4x8x8xf32> to vector<4x8xf32>
    %65 = vector.shape_cast %64 : vector<4x8xf32> to vector<4x8x1xf32>
    %cst_32 = arith.constant 1.000000e+00 : f32
    %66 = vector.broadcast %cst_32 : f32 to vector<4x8x1xf32>
    %67 = arith.divf %66, %65 : vector<4x8x1xf32>
    %68 = vector.broadcast %67 : vector<4x8x1xf32> to vector<4x8x8xf32>
    %69 = arith.mulf %63, %68 : vector<4x8x8xf32>
    %70 = vector.shape_cast %69 : vector<4x8x8xf32> to vector<1x4x8x8xf32>
    %cst_33 = arith.constant dense<0.000000e+00> : vector<1x8x8xf32>
    %71 = vector.multi_reduction <add>, %70, %cst_33 [1] : vector<1x4x8x8xf32> to vector<1x8x8xf32>
    %cst_34 = arith.constant 4.000000e+00 : f32
    %72 = vector.broadcast %cst_34 : f32 to vector<1x8x8xf32>
    %73 = arith.divf %71, %72 : vector<1x8x8xf32>
    %cst_35 = arith.constant 0.000000e+00 : f32
    %74 = vector.broadcast %cst_35 : f32 to vector<1x8x120xf32>
    %75 = tpu.concatenate %73, %74 in 2 : vector<1x8x8xf32>, vector<1x8x120xf32> -> vector<1x8x128xf32>
    %c0_36 = arith.constant 0 : index
    %c0_37 = arith.constant 0 : index
    %c0_38 = arith.constant 0 : index
    %76 = vector.load %arg21[%c0_36, %c0_37, %c0_38] : memref<1x8x128xf32, #tpu.memory_space<vmem>>, vector<1x8x128xf32>
    tpu.vector_store %arg21[%c0_36, %c0_37, %c0_38], %75 {strides = array<i32>} : memref<1x8x128xf32, #tpu.memory_space<vmem>>, vector<1x8x128xf32>,
    %77 = arith.truncf %69 : vector<4x8x8xf32> to vector<4x8x8xbf16>
    "tpu.trace_start"() <{level = 10 : i32, message = "gqk,gkd->gqd"}> : () -> ()
    %cst_39 = arith.constant dense<0.000000e+00> : vector<4x8x8xf32>
    %78 = tpu.matmul %77, %57, %cst_39 {dimension_numbers = #tpu.dot_dimension_numbers<[2], [1], [1], [2], [0, 0, 0, 1, 1, 2], [0], [0]>} : vector<4x8x8xbf16>, vector<4x8x8xbf16>, vector<4x8x8xf32> -> vector<4x8x8xf32>
    "tpu.trace_stop"() : () -> ()
    %79 = vector.shape_cast %78 : vector<4x8x8xf32> to vector<1x4x8x8xf32>
    %80 = tpu.transpose %79, [0, 2, 1, 3] : vector<1x4x8x8xf32> -> vector<1x8x4x8xf32>
    %81 = vector.shape_cast %80 : vector<1x8x4x8xf32> to vector<8x32xf32>
    %82 = arith.truncf %81 : vector<8x32xf32> to vector<8x32xbf16>
    %c0_40 = arith.constant 0 : index
    %c0_41 = arith.constant 0 : index
    %83 = vector.load %arg12[%c0_40, %c0_41] : memref<32x32xbf16, #tpu.memory_space<vmem>>, vector<32x32xbf16>
    %cst_42 = arith.constant dense<0.000000e+00> : vector<8x32xf32>
    %84 = tpu.matmul %82, %83, %cst_42 {dimension_numbers = #tpu.dot_dimension_numbers<[1], [0], [0], [1], [0, 0, 1, 1], [], []>} : vector<8x32xbf16>, vector<32x32xbf16>, vector<8x32xf32> -> vector<8x32xf32>
    %c0_43 = arith.constant 0 : index
    %c0_44 = arith.constant 0 : index
    %85 = vector.load %arg13[%c0_43, %c0_44] : memref<1x32xf32, #tpu.memory_space<vmem>>, vector<1x32xf32>
    %86 = vector.broadcast %85 : vector<1x32xf32> to vector<8x32xf32>
    %87 = arith.addf %84, %86 : vector<8x32xf32>
    %88 = arith.addf %1, %87 : vector<8x32xf32>
    %c0_45 = arith.constant 0 : index
    %c0_46 = arith.constant 0 : index
    %89 = vector.load %arg14[%c0_45, %c0_46] : memref<1x32xf32, #tpu.memory_space<vmem>>, vector<1x32xf32>
    %c0_47 = arith.constant 0 : index
    %c0_48 = arith.constant 0 : index
    %90 = vector.load %arg15[%c0_47, %c0_48] : memref<1x32xf32, #tpu.memory_space<vmem>>, vector<1x32xf32>
    %cst_49 = arith.constant dense<0.000000e+00> : vector<8xf32>
    %91 = vector.multi_reduction <add>, %88, %cst_49 [1] : vector<8x32xf32> to vector<8xf32>
    %92 = vector.shape_cast %91 : vector<8xf32> to vector<8x1xf32>
    %cst_50 = arith.constant 3.200000e+01 : f32
    %93 = vector.broadcast %cst_50 : f32 to vector<8x1xf32>
    %94 = arith.divf %92, %93 : vector<8x1xf32>
    %95 = vector.broadcast %94 : vector<8x1xf32> to vector<8x32xf32>
    %96 = arith.subf %88, %95 : vector<8x32xf32>
    %97 = arith.mulf %96, %96 : vector<8x32xf32>
    %cst_51 = arith.constant dense<0.000000e+00> : vector<8xf32>
    %98 = vector.multi_reduction <add>, %97, %cst_51 [1] : vector<8x32xf32> to vector<8xf32>
    %99 = vector.shape_cast %98 : vector<8xf32> to vector<8x1xf32>
    %cst_52 = arith.constant 3.200000e+01 : f32
    %100 = vector.broadcast %cst_52 : f32 to vector<8x1xf32>
    %101 = arith.divf %99, %100 : vector<8x1xf32>
    %cst_53 = arith.constant 9.99999974E-6 : f32
    %102 = vector.broadcast %cst_53 : f32 to vector<8x1xf32>
    %103 = arith.addf %101, %102 : vector<8x1xf32>
    %104 = math.rsqrt %103 : vector<8x1xf32>
    %105 = vector.broadcast %104 : vector<8x1xf32> to vector<8x32xf32>
    %106 = arith.mulf %96, %105 : vector<8x32xf32>
    %107 = vector.broadcast %89 : vector<1x32xf32> to vector<8x32xf32>
    %108 = arith.mulf %106, %107 : vector<8x32xf32>
    %109 = vector.broadcast %90 : vector<1x32xf32> to vector<8x32xf32>
    %110 = arith.addf %108, %109 : vector<8x32xf32>
    %111 = arith.truncf %110 : vector<8x32xf32> to vector<8x32xbf16>
    %cst_54 = arith.constant 0.000000e+00 : f32
    %112 = vector.broadcast %cst_54 : f32 to vector<8x32xf32>
    %c0_i32 = arith.constant 0 : i32
    %113 = arith.index_cast %c0_i32 : i32 to index
    %c0_55 = arith.constant 0 : index
    %c0_56 = arith.constant 0 : index
    %114 = vector.load %arg16[%113, %c0_55, %c0_56] : memref<1x32x128xbf16, #tpu.memory_space<vmem>>, vector<1x32x128xbf16>
    %115 = vector.shape_cast %114 : vector<1x32x128xbf16> to vector<32x128xbf16>
    %cst_57 = arith.constant dense<0.000000e+00> : vector<8x128xf32>
    %116 = tpu.matmul %111, %115, %cst_57 {dimension_numbers = #tpu.dot_dimension_numbers<[1], [0], [0], [1], [0, 0, 1, 1], [], []>} : vector<8x32xbf16>, vector<32x128xbf16>, vector<8x128xf32> -> vector<8x128xf32>
    %117 = arith.index_cast %c0_i32 : i32 to index
    %c0_58 = arith.constant 0 : index
    %c0_59 = arith.constant 0 : index
    %118 = vector.load %arg17[%117, %c0_58, %c0_59] : memref<1x1x128xf32, #tpu.memory_space<vmem>>, vector<1x1x128xf32>
    %119 = vector.shape_cast %118 : vector<1x1x128xf32> to vector<1x128xf32>
    %120 = vector.broadcast %119 : vector<1x128xf32> to vector<8x128xf32>
    %121 = arith.addf %116, %120 : vector<8x128xf32>
    %cst_60 = arith.constant 5.000000e-01 : f32
    %122 = vector.broadcast %cst_60 : f32 to vector<8x128xf32>
    %123 = arith.mulf %122, %121 : vector<8x128xf32>
    %cst_61 = arith.constant 0.707106769 : f32
    %124 = vector.broadcast %cst_61 : f32 to vector<8x128xf32>
    %125 = arith.mulf %121, %124 : vector<8x128xf32>
    %126 = math.erf %125 : vector<8x128xf32>
    %cst_62 = arith.constant 1.000000e+00 : f32
    %127 = vector.broadcast %cst_62 : f32 to vector<8x128xf32>
    %128 = arith.addf %127, %126 : vector<8x128xf32>
    %129 = arith.mulf %123, %128 : vector<8x128xf32>
    %130 = arith.truncf %129 : vector<8x128xf32> to vector<8x128xbf16>
    %131 = arith.index_cast %c0_i32 : i32 to index
    %c0_63 = arith.constant 0 : index
    %c0_64 = arith.constant 0 : index
    %132 = vector.load %arg18[%131, %c0_63, %c0_64] : memref<1x128x32xbf16, #tpu.memory_space<vmem>>, vector<1x128x32xbf16>
    %133 = vector.shape_cast %132 : vector<1x128x32xbf16> to vector<128x32xbf16>
    %cst_65 = arith.constant dense<0.000000e+00> : vector<8x32xf32>
    %134 = tpu.matmul %130, %133, %cst_65 {dimension_numbers = #tpu.dot_dimension_numbers<[1], [0], [0], [1], [0, 0, 1, 1], [], []>} : vector<8x128xbf16>, vector<128x32xbf16>, vector<8x32xf32> -> vector<8x32xf32>
    %135 = arith.addf %112, %134 : vector<8x32xf32>
    %c1_i32 = arith.constant 1 : i32
    %c0_66 = arith.constant 0 : index
    %c0_67 = arith.constant 0 : index
    %136 = vector.load %arg19[%c0_66, %c0_67] : memref<1x32xf32, #tpu.memory_space<vmem>>, vector<1x32xf32>
    %137 = vector.broadcast %136 : vector<1x32xf32> to vector<8x32xf32>
    %138 = arith.addf %135, %137 : vector<8x32xf32>
    %139 = arith.addf %88, %138 : vector<8x32xf32>
    %140 = vector.shape_cast %139 : vector<8x32xf32> to vector<1x8x32xf32>
    %c0_68 = arith.constant 0 : index
    %c0_69 = arith.constant 0 : index
    %c0_70 = arith.constant 0 : index
    %141 = vector.load %arg20[%c0_68, %c0_69, %c0_70] : memref<1x8x32xf32, #tpu.memory_space<vmem>>, vector<1x8x32xf32>
    tpu.vector_store %arg20[%c0_68, %c0_69, %c0_70], %140 {strides = array<i32>} : memref<1x8x32xf32, #tpu.memory_space<vmem>>, vector<1x8x32xf32>,
    return
  }
  func.func @transform_0(%arg0: i32, %arg1: i32) -> (i32, i32, i32) {
    %c0_i32 = arith.constant 0 : i32
    %c0_i32_0 = arith.constant 0 : i32
    return %arg0, %arg1, %c0_i32 : i32, i32, i32
  }
  func.func @transform_1(%arg0: i32, %arg1: i32) -> (i32, i32, i32) {
    %c0_i32 = arith.constant 0 : i32
    %c0_i32_0 = arith.constant 0 : i32
    %c0_i32_1 = arith.constant 0 : i32
    return %arg0, %c0_i32, %c0_i32_0 : i32, i32, i32
  }
  func.func @transform_2(%arg0: i32, %arg1: i32) -> (i32, i32) {
    %c0_i32 = arith.constant 0 : i32
    %c0_i32_0 = arith.constant 0 : i32
    %c0_i32_1 = arith.constant 0 : i32
    return %c0_i32, %c0_i32_0 : i32, i32
  }
  func.func @transform_3(%arg0: i32, %arg1: i32) -> (i32, i32) {
    %c0_i32 = arith.constant 0 : i32
    %c0_i32_0 = arith.constant 0 : i32
    %c0_i32_1 = arith.constant 0 : i32
    return %c0_i32, %c0_i32_0 : i32, i32
  }
  func.func @transform_4(%arg0: i32, %arg1: i32) -> (i32, i32) {
    %c0_i32 = arith.constant 0 : i32
    %c0_i32_0 = arith.constant 0 : i32
    %c0_i32_1 = arith.constant 0 : i32
    return %c0_i32, %c0_i32_0 : i32, i32
  }
  func.func @transform_5(%arg0: i32, %arg1: i32) -> (i32, i32) {
    %c0_i32 = arith.constant 0 : i32
    %c0_i32_0 = arith.constant 0 : i32
    %c0_i32_1 = arith.constant 0 : i32
    return %c0_i32, %c0_i32_0 : i32, i32
  }
  func.func @transform_6(%arg0: i32, %arg1: i32) -> (i32, i32) {
    %c0_i32 = arith.constant 0 : i32
    %c0_i32_0 = arith.constant 0 : i32
    %c0_i32_1 = arith.constant 0 : i32
    return %c0_i32, %c0_i32_0 : i32, i32
  }
  func.func @transform_7(%arg0: i32, %arg1: i32) -> (i32, i32) {
    %c0_i32 = arith.constant 0 : i32
    %c0_i32_0 = arith.constant 0 : i32
    %c0_i32_1 = arith.constant 0 : i32
    return %c0_i32, %c0_i32_0 : i32, i32
  }
  func.func @transform_8(%arg0: i32, %arg1: i32) -> (i32, i32) {
    %c0_i32 = arith.constant 0 : i32
    %c0_i32_0 = arith.constant 0 : i32
    %c0_i32_1 = arith.constant 0 : i32
    return %c0_i32, %c0_i32_0 : i32, i32
  }
  func.func @transform_9(%arg0: i32, %arg1: i32) -> (i32, i32) {
    %c0_i32 = arith.constant 0 : i32
    %c0_i32_0 = arith.constant 0 : i32
    %c0_i32_1 = arith.constant 0 : i32
    return %c0_i32, %c0_i32_0 : i32, i32
  }
  func.func @transform_10(%arg0: i32, %arg1: i32) -> (i32, i32) {
    %c0_i32 = arith.constant 0 : i32
    %c0_i32_0 = arith.constant 0 : i32
    %c0_i32_1 = arith.constant 0 : i32
    return %c0_i32, %c0_i32_0 : i32, i32
  }
  func.func @transform_11(%arg0: i32, %arg1: i32) -> (i32, i32) {
    %c0_i32 = arith.constant 0 : i32
    %c0_i32_0 = arith.constant 0 : i32
    %c0_i32_1 = arith.constant 0 : i32
    return %c0_i32, %c0_i32_0 : i32, i32
  }
  func.func @transform_12(%arg0: i32, %arg1: i32) -> (i32, i32) {
    %c0_i32 = arith.constant 0 : i32
    %c0_i32_0 = arith.constant 0 : i32
    %c0_i32_1 = arith.constant 0 : i32
    return %c0_i32, %c0_i32_0 : i32, i32
  }
  func.func @transform_13(%arg0: i32, %arg1: i32) -> (i32, i32) {
    %c0_i32 = arith.constant 0 : i32
    %c0_i32_0 = arith.constant 0 : i32
    %c0_i32_1 = arith.constant 0 : i32
    return %c0_i32, %c0_i32_0 : i32, i32
  }
  func.func @transform_14(%arg0: i32, %arg1: i32) -> (i32, i32, i32) {
    %c0_i32 = arith.constant 0 : i32
    %c0_i32_0 = arith.constant 0 : i32
    %c0_i32_1 = arith.constant 0 : i32
    %c0_i32_2 = arith.constant 0 : i32
    return %c0_i32, %c0_i32_0, %c0_i32_1 : i32, i32, i32
  }
  func.func @transform_15(%arg0: i32, %arg1: i32) -> (i32, i32, i32) {
    %c0_i32 = arith.constant 0 : i32
    %c0_i32_0 = arith.constant 0 : i32
    %c0_i32_1 = arith.constant 0 : i32
    %c0_i32_2 = arith.constant 0 : i32
    return %c0_i32, %c0_i32_0, %c0_i32_1 : i32, i32, i32
  }
  func.func @transform_16(%arg0: i32, %arg1: i32) -> (i32, i32, i32) {
    %c0_i32 = arith.constant 0 : i32
    %c0_i32_0 = arith.constant 0 : i32
    %c0_i32_1 = arith.constant 0 : i32
    %c0_i32_2 = arith.constant 0 : i32
    return %c0_i32, %c0_i32_0, %c0_i32_1 : i32, i32, i32
  }
  func.func @transform_17(%arg0: i32, %arg1: i32) -> (i32, i32) {
    %c0_i32 = arith.constant 0 : i32
    %c0_i32_0 = arith.constant 0 : i32
    %c0_i32_1 = arith.constant 0 : i32
    return %c0_i32, %c0_i32_0 : i32, i32
  }
  func.func @transform_18(%arg0: i32, %arg1: i32) -> (i32, i32, i32) {
    %c0_i32 = arith.constant 0 : i32
    %c0_i32_0 = arith.constant 0 : i32
    return %arg0, %arg1, %c0_i32 : i32, i32, i32
  }
  func.func @transform_19(%arg0: i32, %arg1: i32) -> (i32, i32, i32) {
    %c0_i32 = arith.constant 0 : i32
    %c0_i32_0 = arith.constant 0 : i32
    return %arg0, %arg1, %c0_i32 : i32, i32, i32
  }
}

</mosaic_0001>

<llo_original>
// kernel: cross_attention_block.1
$region0: #{cross_attention_block.1}
  #allocation0 [shape = 'u32[]', space=smem, size = 0x4, offset = 0x4, fixed_abs, tag = 'smem constant byte address 0x4 - core index']
  #allocation1 [shape = 'u32[72,128]{1,0:T(1,128)}', space=vmem, size = 0x9000, scoped, tag = 'internal scratch']
  %s0 = inlined_call_operand.vmem [shape: f32[2,8,32], index: 0, kind: input, shape index: {}]
  %s1 = inlined_call_operand.vmem [shape: f32[2,8,32], index: 1, kind: input, shape index: {}]
  %s2 = inlined_call_operand.vmem [shape: f32[1,32], index: 2, kind: input, shape index: {}]
  %s3 = inlined_call_operand.vmem [shape: f32[1,32], index: 3, kind: input, shape index: {}]
  %s4 = inlined_call_operand.vmem [shape: bf16[32,32], index: 4, kind: input, shape index: {}]
  %s5 = inlined_call_operand.vmem [shape: bf16[32,32], index: 5, kind: input, shape index: {}]
  %s6 = inlined_call_operand.vmem [shape: bf16[32,32], index: 6, kind: input, shape index: {}]
  %s7 = inlined_call_operand.vmem [shape: f32[1,32], index: 7, kind: input, shape index: {}]
  %s8 = inlined_call_operand.hbm [shape: f32[1,32], index: 8, kind: input, shape index: {}]
  %s9 = inlined_call_operand.vmem [shape: f32[1,32], index: 9, kind: input, shape index: {}]
  %s10 = inlined_call_operand.hbm [shape: bf16[32,32], index: 10, kind: input, shape index: {}]
  %s11 = inlined_call_operand.hbm [shape: f32[1,32], index: 11, kind: input, shape index: {}]
  %s12 = inlined_call_operand.vmem [shape: f32[1,32], index: 12, kind: input, shape index: {}]
  %s13 = inlined_call_operand.vmem [shape: f32[1,32], index: 13, kind: input, shape index: {}]
  %s14 = inlined_call_operand.hbm [shape: bf16[1,32,128], index: 14, kind: input, shape index: {}]
  %s15 = inlined_call_operand.hbm [shape: f32[1,1,128], index: 15, kind: input, shape index: {}]
  %s16 = inlined_call_operand.vmem [shape: bf16[1,128,32], index: 16, kind: input, shape index: {}]
  %s17 = inlined_call_operand.hbm [shape: f32[1,32], index: 17, kind: input, shape index: {}]
  %s18 = inlined_call_operand.hbm [shape: f32[2,8,32], index: 18, kind: output, shape index: {0}]
  %s19 = inlined_call_operand.hbm [shape: f32[2,8,128], index: 19, kind: output, shape index: {1}]
  %20 = xla_tuple %s18, %s19
  %s21 = sld [smem:[#allocation0]]
  $region137: #{cross_attention_block.1} parent=0
    _
  %s23 = ssub.s32 1, %s21
  %s24 = scalar_select 0, %s23, %s21
  $region1: #{cross_attention_block.1} parent=0
    #allocation2 [shape = 'u8[512]{0}', space=vmem, size = 0x400, scoped, tag = 'input window, operand 8, single buffered']
    #allocation3 [shape = 's32[2]{0}', space=sflag, size = 0x8, scoped, tag = 'scoped memory for cross_attention_block.1']
    #allocation4 [shape = 's32[2]{0}', space=sflag, size = 0x8, scoped, tag = 'scoped memory for cross_attention_block.1']
    #allocation5 [shape = 'u8[8192]{0}', space=vmem, size = 0x2000, scoped, tag = 'input window, operand 10, single buffered']
    #allocation6 [shape = 's32[1]{0}', space=sflag, size = 0x4, scoped, tag = 'scoped memory for cross_attention_block.1']
    #allocation7 [shape = 'u8[512]{0}', space=vmem, size = 0x400, scoped, tag = 'input window, operand 11, single buffered']
    #allocation8 [shape = 'u8[8192]{0}', space=vmem, size = 0x2000, scoped, tag = 'input window, operand 14, single buffered']
    #allocation9 [shape = 's32[1]{0}', space=sflag, size = 0x4, scoped, tag = 'scoped memory for cross_attention_block.1']
    #allocation10 [shape = 'u8[512]{0}', space=vmem, size = 0x400, scoped, tag = 'input window, operand 15, single buffered']
    #allocation11 [shape = 'u8[512]{0}', space=vmem, size = 0x400, scoped, tag = 'input window, operand 17, single buffered']
    #allocation12 [shape = 's32[1]{0}', space=sflag, size = 0x4, scoped, tag = 'scoped memory for cross_attention_block.1']
    #allocation13 [shape = 'u8[8192]{0}', space=vmem, size = 0x2000, scoped, tag = 'output window, operand 0']
    #allocation14 [shape = 'u8[8192]{0}', space=vmem, size = 0x2000, scoped, tag = 'output window, operand 1']
    #allocation15 [shape = 's32[2]{0}', space=sflag, size = 0x8, scoped, tag = 'scoped memory for cross_attention_block.1']
    %25 = vsyncpa [#allocation3], 0
    %26 = vsyncpa [#allocation6], 0
    %27 = vsyncpa [#allocation9], 0
    %28 = vsyncpa [#allocation12], 0
    %29 = vsyncpa [#allocation4], 0
    %s30 = scalar_lea.sflag [#allocation4], 1
    %31 = vsyncpa %s30, 0
    %32 = vsyncpa [#allocation15], 0
    %s33 = scalar_lea.sflag [#allocation15], 1
    %34 = vsyncpa %s33, 0
    loop: start=0, step=1, limit=4
    $region2: #{cross_attention_block.1} parent=1 // loop_pre_header
      _
    $region3: #{cross_attention_block.1} parent=1 // loop_header
      %s36 = sphi 0, %s40
      %p37 = scmp.ge.s32.totalorder %s36, 4
      %s43 = sphi 0, %s55
      %s44 = sphi 0, %s51
      %s45 = sphi 0, %s43
      %s46 = sphi 0, %s44
      %s47 = sphi 0, %s45
      %s48 = sphi 0, %s46
      %s60 = sphi 0, %s62
      %s63 = sphi 0, %s60
      %s64 = sphi 0, %s63
      %s80 = sphi 0, %s64
      %s86 = sphi 0, %s88
      %s89 = sphi 0, %s86
      %s90 = sphi 0, %s89
      %s106 = sphi 0, %s90
      %s110 = sphi 0, %s110
      %s112 = sphi 0, %s110
      %s113 = sphi 0, %s112
      %s127 = sphi 0, %s113
      %s131 = sphi 0, %s131
      %s133 = sphi 0, %s131
      %s134 = sphi 0, %s133
      %s148 = sphi 0, %s134
      %s152 = sphi 0, %s152
      %s154 = sphi 0, %s152
      %s155 = sphi 0, %s154
      %s169 = sphi 0, %s155
      %s173 = sphi 0, %s173
      %s175 = sphi 0, %s173
      %s176 = sphi 0, %s175
      %s190 = sphi 0, %s176
      %s194 = sphi 0, %s194
      %s196 = sphi 0, %s194
      %s197 = sphi 0, %s196
      %s211 = sphi 0, %s197
      %s215 = sphi 0, %s215
      %s217 = sphi 0, %s215
      %s218 = sphi 0, %s217
      %s232 = sphi 0, %s218
      %s236 = sphi 0, %s236
      %s238 = sphi 0, %s236
      %s239 = sphi 0, %s238
      %s253 = sphi 0, %s239
      %s257 = sphi 0, %s257
      %s259 = sphi 0, %s257
      %s260 = sphi 0, %s259
      %s274 = sphi 0, %s260
      %s278 = sphi 0, %s278
      %s280 = sphi 0, %s278
      %s281 = sphi 0, %s280
      %s295 = sphi 0, %s281
      %s299 = sphi 0, %s299
      %s301 = sphi 0, %s299
      %s302 = sphi 0, %s301
      %s316 = sphi 0, %s302
      %s320 = sphi 0, %s320
      %s322 = sphi 0, %s320
      %s323 = sphi 0, %s322
      %s337 = sphi 0, %s323
      %s341 = sphi 0, %s341
      %s343 = sphi 0, %s341
      %s344 = sphi 0, %s343
      %s358 = sphi 0, %s344
      %s362 = sphi 0, %s362
      %s364 = sphi 0, %s362
      %s365 = sphi 0, %s364
      %s379 = sphi 0, %s365
      %s383 = sphi 0, %s383
      %s385 = sphi 0, %s383
      %s386 = sphi 0, %s385
      %s400 = sphi 0, %s386
      %s404 = sphi 0, %s404
      %s406 = sphi 0, %s404
      %s407 = sphi 0, %s406
      %s421 = sphi 0, %s407
      %s425 = sphi 0, %s425
      %s427 = sphi 0, %s425
      %s428 = sphi 0, %s427
      %s442 = sphi 0, %s428
      %s450 = sphi 0, %s452
      %s453 = sphi 0, %s450
      %s454 = sphi 0, %s453
      %s470 = sphi 0, %s454
      %s478 = sphi 0, %s480
      %s481 = sphi 0, %s478
      %s482 = sphi 0, %s481
      %s498 = sphi 0, %s482
    $region4: #{cross_attention_block.1} parent=1 // loop_header_branch
      %39 = sbr.rel (%p37) target = $region8
    $region5: #{cross_attention_block.1} parent=1 // loop_body
      %s41 = ssub.s32 %s36, 1
      %s42 = ssub.s32 %s36, 2
      %s49 = sadd.s32 1, %s44
      %p50 = scmp.ge.s32.totalorder %s49, 1
      %s51 = scalar_select %p50, 0, %s49
      %s52 = sadd.s32 1, %s43
      %s53 = scalar_select %p50, %s52, %s43
      %p54 = scmp.ge.s32.totalorder %s53, 2
      %s55 = scalar_select %p54, 0, %s53
      %s56 = ssub.s32 %s43, %s55
      %s57 = ssub.s32 %s44, %s51
      %s58 = sor.u32 %s56, %s57
      %p59 = scmp.eq.s32.totalorder %s58, 0
      %s61 = sadd.s32 %s60, 1
      %s62 = scalar_select %p59, %s60, %s61
      %p65 = pneg %p59
      %p66 = scmp.eq.s32.totalorder %s36, 1
      %p67 = por %p65, %p66
      %p68 = scmp.ne.s32.totalorder %s60, %s63
      %p69 = scmp.eq.s32.totalorder %s36, 0
      %p70 = por %p68, %p69
      %p71 = scmp.ne.s32.totalorder %s60, %s63
      %p72 = scmp.eq.s32.totalorder %s41, 1
      %p73 = por %p71, %p72
      %p74 = scmp.ne.s32.totalorder %s63, %s64
      %p75 = scmp.eq.s32.totalorder %s41, 0
      %p76 = por %p74, %p75
      %p77 = scmp.ne.s32.totalorder %s63, %s64
      %p78 = scmp.eq.s32.totalorder %s42, 1
      %p79 = por %p77, %p78
      %p81 = scmp.ne.s32.totalorder %s64, %s80
      %p82 = scmp.eq.s32.totalorder %s42, 0
      %p83 = por %p81, %p82
      %s84 = ssub.s32 %s43, %s55
      %p85 = scmp.eq.s32.totalorder %s84, 0
      %s87 = sadd.s32 %s86, 1
      %s88 = scalar_select %p85, %s86, %s87
      %p91 = pneg %p85
      %p92 = scmp.eq.s32.totalorder %s36, 1
      %p93 = por %p91, %p92
      %p94 = scmp.ne.s32.totalorder %s86, %s89
      %p95 = scmp.eq.s32.totalorder %s36, 0
      %p96 = por %p94, %p95
      %p97 = scmp.ne.s32.totalorder %s86, %s89
      %p98 = scmp.eq.s32.totalorder %s41, 1
      %p99 = por %p97, %p98
      %p100 = scmp.ne.s32.totalorder %s89, %s90
      %p101 = scmp.eq.s32.totalorder %s41, 0
      %p102 = por %p100, %p101
      %p103 = scmp.ne.s32.totalorder %s89, %s90
      %p104 = scmp.eq.s32.totalorder %s42, 1
      %p105 = por %p103, %p104
      %p107 = scmp.ne.s32.totalorder %s90, %s106
      %p108 = scmp.eq.s32.totalorder %s42, 0
      %p109 = por %p107, %p108
      %s111 = sadd.s32 %s110, 1
      %p114 = scmp.eq.s32.totalorder %s36, 1
      %p115 = scmp.ne.s32.totalorder %s110, %s112
      %p116 = scmp.eq.s32.totalorder %s36, 0
      %p117 = por %p115, %p116
      %p118 = scmp.ne.s32.totalorder %s110, %s112
      %p119 = scmp.eq.s32.totalorder %s41, 1
      %p120 = por %p118, %p119
      %p121 = scmp.ne.s32.totalorder %s112, %s113
      %p122 = scmp.eq.s32.totalorder %s41, 0
      %p123 = por %p121, %p122
      %p124 = scmp.ne.s32.totalorder %s112, %s113
      %p125 = scmp.eq.s32.totalorder %s42, 1
      %p126 = por %p124, %p125
      %p128 = scmp.ne.s32.totalorder %s113, %s127
      %p129 = scmp.eq.s32.totalorder %s42, 0
      %p130 = por %p128, %p129
      %s132 = sadd.s32 %s131, 1
      %p135 = scmp.eq.s32.totalorder %s36, 1
      %p136 = scmp.ne.s32.totalorder %s131, %s133
      %p137 = scmp.eq.s32.totalorder %s36, 0
      %p138 = por %p136, %p137
      %p139 = scmp.ne.s32.totalorder %s131, %s133
      %p140 = scmp.eq.s32.totalorder %s41, 1
      %p141 = por %p139, %p140
      %p142 = scmp.ne.s32.totalorder %s133, %s134
      %p143 = scmp.eq.s32.totalorder %s41, 0
      %p144 = por %p142, %p143
      %p145 = scmp.ne.s32.totalorder %s133, %s134
      %p146 = scmp.eq.s32.totalorder %s42, 1
      %p147 = por %p145, %p146
      %p149 = scmp.ne.s32.totalorder %s134, %s148
      %p150 = scmp.eq.s32.totalorder %s42, 0
      %p151 = por %p149, %p150
      %s153 = sadd.s32 %s152, 1
      %p156 = scmp.eq.s32.totalorder %s36, 1
      %p157 = scmp.ne.s32.totalorder %s152, %s154
      %p158 = scmp.eq.s32.totalorder %s36, 0
      %p159 = por %p157, %p158
      %p160 = scmp.ne.s32.totalorder %s152, %s154
      %p161 = scmp.eq.s32.totalorder %s41, 1
      %p162 = por %p160, %p161
      %p163 = scmp.ne.s32.totalorder %s154, %s155
      %p164 = scmp.eq.s32.totalorder %s41, 0
      %p165 = por %p163, %p164
      %p166 = scmp.ne.s32.totalorder %s154, %s155
      %p167 = scmp.eq.s32.totalorder %s42, 1
      %p168 = por %p166, %p167
      %p170 = scmp.ne.s32.totalorder %s155, %s169
      %p171 = scmp.eq.s32.totalorder %s42, 0
      %p172 = por %p170, %p171
      %s174 = sadd.s32 %s173, 1
      %p177 = scmp.eq.s32.totalorder %s36, 1
      %p178 = scmp.ne.s32.totalorder %s173, %s175
      %p179 = scmp.eq.s32.totalorder %s36, 0
      %p180 = por %p178, %p179
      %p181 = scmp.ne.s32.totalorder %s173, %s175
      %p182 = scmp.eq.s32.totalorder %s41, 1
      %p183 = por %p181, %p182
      %p184 = scmp.ne.s32.totalorder %s175, %s176
      %p185 = scmp.eq.s32.totalorder %s41, 0
      %p186 = por %p184, %p185
      %p187 = scmp.ne.s32.totalorder %s175, %s176
      %p188 = scmp.eq.s32.totalorder %s42, 1
      %p189 = por %p187, %p188
      %p191 = scmp.ne.s32.totalorder %s176, %s190
      %p192 = scmp.eq.s32.totalorder %s42, 0
      %p193 = por %p191, %p192
      %s195 = sadd.s32 %s194, 1
      %p198 = scmp.eq.s32.totalorder %s36, 1
      %p199 = scmp.ne.s32.totalorder %s194, %s196
      %p200 = scmp.eq.s32.totalorder %s36, 0
      %p201 = por %p199, %p200
      %p202 = scmp.ne.s32.totalorder %s194, %s196
      %p203 = scmp.eq.s32.totalorder %s41, 1
      %p204 = por %p202, %p203
      %p205 = scmp.ne.s32.totalorder %s196, %s197
      %p206 = scmp.eq.s32.totalorder %s41, 0
      %p207 = por %p205, %p206
      %p208 = scmp.ne.s32.totalorder %s196, %s197
      %p209 = scmp.eq.s32.totalorder %s42, 1
      %p210 = por %p208, %p209
      %p212 = scmp.ne.s32.totalorder %s197, %s211
      %p213 = scmp.eq.s32.totalorder %s42, 0
      %p214 = por %p212, %p213
      %s216 = sadd.s32 %s215, 1
      %p219 = scmp.eq.s32.totalorder %s36, 1
      %p220 = scmp.ne.s32.totalorder %s215, %s217
      %p221 = scmp.eq.s32.totalorder %s36, 0
      %p222 = por %p220, %p221
      %p223 = scmp.ne.s32.totalorder %s215, %s217
      %p224 = scmp.eq.s32.totalorder %s41, 1
      %p225 = por %p223, %p224
      %p226 = scmp.ne.s32.totalorder %s217, %s218
      %p227 = scmp.eq.s32.totalorder %s41, 0
      %p228 = por %p226, %p227
      %p229 = scmp.ne.s32.totalorder %s217, %s218
      %p230 = scmp.eq.s32.totalorder %s42, 1
      %p231 = por %p229, %p230
      %p233 = scmp.ne.s32.totalorder %s218, %s232
      %p234 = scmp.eq.s32.totalorder %s42, 0
      %p235 = por %p233, %p234
      %s237 = sadd.s32 %s236, 1
      %p240 = scmp.eq.s32.totalorder %s36, 1
      %p241 = scmp.ne.s32.totalorder %s236, %s238
      %p242 = scmp.eq.s32.totalorder %s36, 0
      %p243 = por %p241, %p242
      %p244 = scmp.ne.s32.totalorder %s236, %s238
      %p245 = scmp.eq.s32.totalorder %s41, 1
      %p246 = por %p244, %p245
      %p247 = scmp.ne.s32.totalorder %s238, %s239
      %p248 = scmp.eq.s32.totalorder %s41, 0
      %p249 = por %p247, %p248
      %p250 = scmp.ne.s32.totalorder %s238, %s239
      %p251 = scmp.eq.s32.totalorder %s42, 1
      %p252 = por %p250, %p251
      %p254 = scmp.ne.s32.totalorder %s239, %s253
      %p255 = scmp.eq.s32.totalorder %s42, 0
      %p256 = por %p254, %p255
      %s258 = sadd.s32 %s257, 1
      %p261 = scmp.eq.s32.totalorder %s36, 1
      %p262 = scmp.ne.s32.totalorder %s257, %s259
      %p263 = scmp.eq.s32.totalorder %s36, 0
      %p264 = por %p262, %p263
      %p265 = scmp.ne.s32.totalorder %s257, %s259
      %p266 = scmp.eq.s32.totalorder %s41, 1
      %p267 = por %p265, %p266
      %p268 = scmp.ne.s32.totalorder %s259, %s260
      %p269 = scmp.eq.s32.totalorder %s41, 0
      %p270 = por %p268, %p269
      %p271 = scmp.ne.s32.totalorder %s259, %s260
      %p272 = scmp.eq.s32.totalorder %s42, 1
      %p273 = por %p271, %p272
      %p275 = scmp.ne.s32.totalorder %s260, %s274
      %p276 = scmp.eq.s32.totalorder %s42, 0
      %p277 = por %p275, %p276
      %s279 = sadd.s32 %s278, 1
      %p282 = scmp.eq.s32.totalorder %s36, 1
      %p283 = scmp.ne.s32.totalorder %s278, %s280
      %p284 = scmp.eq.s32.totalorder %s36, 0
      %p285 = por %p283, %p284
      %p286 = scmp.ne.s32.totalorder %s278, %s280
      %p287 = scmp.eq.s32.totalorder %s41, 1
      %p288 = por %p286, %p287
      %p289 = scmp.ne.s32.totalorder %s280, %s281
      %p290 = scmp.eq.s32.totalorder %s41, 0
      %p291 = por %p289, %p290
      %p292 = scmp.ne.s32.totalorder %s280, %s281
      %p293 = scmp.eq.s32.totalorder %s42, 1
      %p294 = por %p292, %p293
      %p296 = scmp.ne.s32.totalorder %s281, %s295
      %p297 = scmp.eq.s32.totalorder %s42, 0
      %p298 = por %p296, %p297
      %s300 = sadd.s32 %s299, 1
      %p303 = scmp.eq.s32.totalorder %s36, 1
      %p304 = scmp.ne.s32.totalorder %s299, %s301
      %p305 = scmp.eq.s32.totalorder %s36, 0
      %p306 = por %p304, %p305
      %p307 = scmp.ne.s32.totalorder %s299, %s301
      %p308 = scmp.eq.s32.totalorder %s41, 1
      %p309 = por %p307, %p308
      %p310 = scmp.ne.s32.totalorder %s301, %s302
      %p311 = scmp.eq.s32.totalorder %s41, 0
      %p312 = por %p310, %p311
      %p313 = scmp.ne.s32.totalorder %s301, %s302
      %p314 = scmp.eq.s32.totalorder %s42, 1
      %p315 = por %p313, %p314
      %p317 = scmp.ne.s32.totalorder %s302, %s316
      %p318 = scmp.eq.s32.totalorder %s42, 0
      %p319 = por %p317, %p318
      %s321 = sadd.s32 %s320, 1
      %p324 = scmp.eq.s32.totalorder %s36, 1
      %p325 = scmp.ne.s32.totalorder %s320, %s322
      %p326 = scmp.eq.s32.totalorder %s36, 0
      %p327 = por %p325, %p326
      %p328 = scmp.ne.s32.totalorder %s320, %s322
      %p329 = scmp.eq.s32.totalorder %s41, 1
      %p330 = por %p328, %p329
      %p331 = scmp.ne.s32.totalorder %s322, %s323
      %p332 = scmp.eq.s32.totalorder %s41, 0
      %p333 = por %p331, %p332
      %p334 = scmp.ne.s32.totalorder %s322, %s323
      %p335 = scmp.eq.s32.totalorder %s42, 1
      %p336 = por %p334, %p335
      %p338 = scmp.ne.s32.totalorder %s323, %s337
      %p339 = scmp.eq.s32.totalorder %s42, 0
      %p340 = por %p338, %p339
      %s342 = sadd.s32 %s341, 1
      %p345 = scmp.eq.s32.totalorder %s36, 1
      %p346 = scmp.ne.s32.totalorder %s341, %s343
      %p347 = scmp.eq.s32.totalorder %s36, 0
      %p348 = por %p346, %p347
      %p349 = scmp.ne.s32.totalorder %s341, %s343
      %p350 = scmp.eq.s32.totalorder %s41, 1
      %p351 = por %p349, %p350
      %p352 = scmp.ne.s32.totalorder %s343, %s344
      %p353 = scmp.eq.s32.totalorder %s41, 0
      %p354 = por %p352, %p353
      %p355 = scmp.ne.s32.totalorder %s343, %s344
      %p356 = scmp.eq.s32.totalorder %s42, 1
      %p357 = por %p355, %p356
      %p359 = scmp.ne.s32.totalorder %s344, %s358
      %p360 = scmp.eq.s32.totalorder %s42, 0
      %p361 = por %p359, %p360
      %s363 = sadd.s32 %s362, 1
      %p366 = scmp.eq.s32.totalorder %s36, 1
      %p367 = scmp.ne.s32.totalorder %s362, %s364
      %p368 = scmp.eq.s32.totalorder %s36, 0
      %p369 = por %p367, %p368
      %p370 = scmp.ne.s32.totalorder %s362, %s364
      %p371 = scmp.eq.s32.totalorder %s41, 1
      %p372 = por %p370, %p371
      %p373 = scmp.ne.s32.totalorder %s364, %s365
      %p374 = scmp.eq.s32.totalorder %s41, 0
      %p375 = por %p373, %p374
      %p376 = scmp.ne.s32.totalorder %s364, %s365
      %p377 = scmp.eq.s32.totalorder %s42, 1
      %p378 = por %p376, %p377
      %p380 = scmp.ne.s32.totalorder %s365, %s379
      %p381 = scmp.eq.s32.totalorder %s42, 0
      %p382 = por %p380, %p381
      %s384 = sadd.s32 %s383, 1
      %p387 = scmp.eq.s32.totalorder %s36, 1
      %p388 = scmp.ne.s32.totalorder %s383, %s385
      %p389 = scmp.eq.s32.totalorder %s36, 0
      %p390 = por %p388, %p389
      %p391 = scmp.ne.s32.totalorder %s383, %s385
      %p392 = scmp.eq.s32.totalorder %s41, 1
      %p393 = por %p391, %p392
      %p394 = scmp.ne.s32.totalorder %s385, %s386
      %p395 = scmp.eq.s32.totalorder %s41, 0
      %p396 = por %p394, %p395
      %p397 = scmp.ne.s32.totalorder %s385, %s386
      %p398 = scmp.eq.s32.totalorder %s42, 1
      %p399 = por %p397, %p398
      %p401 = scmp.ne.s32.totalorder %s386, %s400
      %p402 = scmp.eq.s32.totalorder %s42, 0
      %p403 = por %p401, %p402
      %s405 = sadd.s32 %s404, 1
      %p408 = scmp.eq.s32.totalorder %s36, 1
      %p409 = scmp.ne.s32.totalorder %s404, %s406
      %p410 = scmp.eq.s32.totalorder %s36, 0
      %p411 = por %p409, %p410
      %p412 = scmp.ne.s32.totalorder %s404, %s406
      %p413 = scmp.eq.s32.totalorder %s41, 1
      %p414 = por %p412, %p413
      %p415 = scmp.ne.s32.totalorder %s406, %s407
      %p416 = scmp.eq.s32.totalorder %s41, 0
      %p417 = por %p415, %p416
      %p418 = scmp.ne.s32.totalorder %s406, %s407
      %p419 = scmp.eq.s32.totalorder %s42, 1
      %p420 = por %p418, %p419
      %p422 = scmp.ne.s32.totalorder %s407, %s421
      %p423 = scmp.eq.s32.totalorder %s42, 0
      %p424 = por %p422, %p423
      %s426 = sadd.s32 %s425, 1
      %p429 = scmp.eq.s32.totalorder %s36, 1
      %p430 = scmp.ne.s32.totalorder %s425, %s427
      %p431 = scmp.eq.s32.totalorder %s36, 0
      %p432 = por %p430, %p431
      %p433 = scmp.ne.s32.totalorder %s425, %s427
      %p434 = scmp.eq.s32.totalorder %s41, 1
      %p435 = por %p433, %p434
      %p436 = scmp.ne.s32.totalorder %s427, %s428
      %p437 = scmp.eq.s32.totalorder %s41, 0
      %p438 = por %p436, %p437
      %p439 = scmp.ne.s32.totalorder %s427, %s428
      %p440 = scmp.eq.s32.totalorder %s42, 1
      %p441 = por %p439, %p440
      %p443 = scmp.ne.s32.totalorder %s428, %s442
      %p444 = scmp.eq.s32.totalorder %s42, 0
      %p445 = por %p443, %p444
      %s446 = ssub.s32 %s43, %s55
      %s447 = ssub.s32 %s44, %s51
      %s448 = sor.u32 %s446, %s447
      %p449 = scmp.eq.s32.totalorder %s448, 0
      %s451 = sadd.s32 %s450, 1
      %s452 = scalar_select %p449, %s450, %s451
      %p455 = pneg %p449
      %p456 = scmp.eq.s32.totalorder %s36, 1
      %p457 = por %p455, %p456
      %p458 = scmp.ne.s32.totalorder %s450, %s453
      %p459 = scmp.eq.s32.totalorder %s36, 0
      %p460 = por %p458, %p459
      %p461 = scmp.ne.s32.totalorder %s450, %s453
      %p462 = scmp.eq.s32.totalorder %s41, 1
      %p463 = por %p461, %p462
      %p464 = scmp.ne.s32.totalorder %s453, %s454
      %p465 = scmp.eq.s32.totalorder %s41, 0
      %p466 = por %p464, %p465
      %p467 = scmp.ne.s32.totalorder %s453, %s454
      %p468 = scmp.eq.s32.totalorder %s42, 1
      %p469 = por %p467, %p468
      %p471 = scmp.ne.s32.totalorder %s454, %s470
      %p472 = scmp.eq.s32.totalorder %s42, 0
      %p473 = por %p471, %p472
      %s474 = ssub.s32 %s43, %s55
      %s475 = ssub.s32 %s44, %s51
      %s476 = sor.u32 %s474, %s475
      %p477 = scmp.eq.s32.totalorder %s476, 0
      %s479 = sadd.s32 %s478, 1
      %s480 = scalar_select %p477, %s478, %s479
      %p483 = pneg %p477
      %p484 = scmp.eq.s32.totalorder %s36, 1
      %p485 = por %p483, %p484
      %p486 = scmp.ne.s32.totalorder %s478, %s481
      %p487 = scmp.eq.s32.totalorder %s36, 0
      %p488 = por %p486, %p487
      %p489 = scmp.ne.s32.totalorder %s478, %s481
      %p490 = scmp.eq.s32.totalorder %s41, 1
      %p491 = por %p489, %p490
      %p492 = scmp.ne.s32.totalorder %s481, %s482
      %p493 = scmp.eq.s32.totalorder %s41, 0
      %p494 = por %p492, %p493
      %p495 = scmp.ne.s32.totalorder %s481, %s482
      %p496 = scmp.eq.s32.totalorder %s42, 1
      %p497 = por %p495, %p496
      %p499 = scmp.ne.s32.totalorder %s482, %s498
      %p500 = scmp.eq.s32.totalorder %s42, 0
      %p501 = por %p499, %p500
      %p502 = scmp.le.s32.totalorder 1, %s36
      %p503 = scmp.lt.s32.totalorder %s36, 3
      %p504 = pnand %p502, %p503
      %p505 = pneg %p504
      // Predicated region
      $region9: #{cross_attention_block.1} parent=5 // pred_check
        _
      $region10: #{cross_attention_block.1} parent=5 // pred_check_branch
        %507 = sbr.rel (%p504) target = $region12
      $region11: #{cross_attention_block.1} parent=5 // pred_region
        %s508 = ssub.s32 %s36, 1
        // Predicated region
        $region13: #{cross_attention_block.1} parent=11 // pred_check
          %p509 = pneg %p123
        $region14: #{cross_attention_block.1} parent=11 // pred_check_branch
          %511 = sbr.rel (%p509) target = $region16
        $region15: #{cross_attention_block.1} parent=11 // pred_region
          _
        $region16: #{cross_attention_block.1} parent=11 // pred_fallthru
          _
        // Predicated region
        $region17: #{cross_attention_block.1} parent=11 // pred_check
          %p512 = pneg %p144
        $region18: #{cross_attention_block.1} parent=11 // pred_check_branch
          %514 = sbr.rel (%p512) target = $region20
        $region19: #{cross_attention_block.1} parent=11 // pred_region
          _
        $region20: #{cross_attention_block.1} parent=11 // pred_fallthru
          _
        // Predicated region
        $region21: #{cross_attention_block.1} parent=11 // pred_check
          %p515 = pneg %p165
        $region22: #{cross_attention_block.1} parent=11 // pred_check_branch
          %517 = sbr.rel (%p515) target = $region24
        $region23: #{cross_attention_block.1} parent=11 // pred_region
          _
        $region24: #{cross_attention_block.1} parent=11 // pred_fallthru
          _
        // Predicated region
        $region25: #{cross_attention_block.1} parent=11 // pred_check
          %p518 = pneg %p186
        $region26: #{cross_attention_block.1} parent=11 // pred_check_branch
          %520 = sbr.rel (%p518) target = $region28
        $region27: #{cross_attention_block.1} parent=11 // pred_region
          _
        $region28: #{cross_attention_block.1} parent=11 // pred_fallthru
          _
        // Predicated region
        $region29: #{cross_attention_block.1} parent=11 // pred_check
          %p521 = pneg %p207
        $region30: #{cross_attention_block.1} parent=11 // pred_check_branch
          %523 = sbr.rel (%p521) target = $region32
        $region31: #{cross_attention_block.1} parent=11 // pred_region
          _
        $region32: #{cross_attention_block.1} parent=11 // pred_fallthru
          _
        // Predicated region
        $region33: #{cross_attention_block.1} parent=11 // pred_check
          %p524 = pneg %p228
        $region34: #{cross_attention_block.1} parent=11 // pred_check_branch
          %526 = sbr.rel (%p524) target = $region36
        $region35: #{cross_attention_block.1} parent=11 // pred_region
          _
        $region36: #{cross_attention_block.1} parent=11 // pred_fallthru
          _
        // Predicated region
        $region37: #{cross_attention_block.1} parent=11 // pred_check
          %p527 = pneg %p249
        $region38: #{cross_attention_block.1} parent=11 // pred_check_branch
          %529 = sbr.rel (%p527) target = $region40
        $region39: #{cross_attention_block.1} parent=11 // pred_region
          %531 = vsyncadd [#allocation3], 0
          %s533 = sshll.u32 %s8, 4
          %s534 = int_to_ptr.hbm [resolvable:$true] %s533
          %s535 = sshll.u32 [#allocation2], 4
          %s536 = int_to_ptr.vmem [resolvable:$true] %s535
          %538 = dma.hbm_to_vmem [thread:$0]  %s534, 16, %s536, [#allocation3]
        $region40: #{cross_attention_block.1} parent=11 // pred_fallthru
          _
        // Predicated region
        $region41: #{cross_attention_block.1} parent=11 // pred_check
          %p539 = pneg %p270
        $region42: #{cross_attention_block.1} parent=11 // pred_check_branch
          %541 = sbr.rel (%p539) target = $region44
        $region43: #{cross_attention_block.1} parent=11 // pred_region
          _
        $region44: #{cross_attention_block.1} parent=11 // pred_fallthru
          _
        // Predicated region
        $region45: #{cross_attention_block.1} parent=11 // pred_check
          %p542 = pneg %p291
        $region46: #{cross_attention_block.1} parent=11 // pred_check_branch
          %544 = sbr.rel (%p542) target = $region48
        $region47: #{cross_attention_block.1} parent=11 // pred_region
          %546 = vsyncadd [#allocation6], 0
          %s547 = sshll.u32 %s10, 4
          %s548 = int_to_ptr.hbm [resolvable:$true] %s547
          %s549 = sshll.u32 [#allocation5], 4
          %s550 = int_to_ptr.vmem [resolvable:$true] %s549
          %555 = dma.hbm_to_vmem [thread:$0]  %s548, 256, %s550, [#allocation6], 64, 64, 4
        $region48: #{cross_attention_block.1} parent=11 // pred_fallthru
          _
        // Predicated region
        $region49: #{cross_attention_block.1} parent=11 // pred_check
          %p556 = pneg %p312
        $region50: #{cross_attention_block.1} parent=11 // pred_check_branch
          %558 = sbr.rel (%p556) target = $region52
        $region51: #{cross_attention_block.1} parent=11 // pred_region
          %560 = vsyncadd [#allocation6], 0
          %s562 = sshll.u32 %s11, 4
          %s563 = int_to_ptr.hbm [resolvable:$true] %s562
          %s564 = sshll.u32 [#allocation7], 4
          %s565 = int_to_ptr.vmem [resolvable:$true] %s564
          %567 = dma.hbm_to_vmem [thread:$0]  %s563, 16, %s565, [#allocation6]
        $region52: #{cross_attention_block.1} parent=11 // pred_fallthru
          _
        // Predicated region
        $region53: #{cross_attention_block.1} parent=11 // pred_check
          %p568 = pneg %p333
        $region54: #{cross_attention_block.1} parent=11 // pred_check_branch
          %570 = sbr.rel (%p568) target = $region56
        $region55: #{cross_attention_block.1} parent=11 // pred_region
          _
        $region56: #{cross_attention_block.1} parent=11 // pred_fallthru
          _
        // Predicated region
        $region57: #{cross_attention_block.1} parent=11 // pred_check
          %p571 = pneg %p354
        $region58: #{cross_attention_block.1} parent=11 // pred_check_branch
          %573 = sbr.rel (%p571) target = $region60
        $region59: #{cross_attention_block.1} parent=11 // pred_region
          _
        $region60: #{cross_attention_block.1} parent=11 // pred_fallthru
          _
        // Predicated region
        $region61: #{cross_attention_block.1} parent=11 // pred_check
          %p574 = pneg %p375
        $region62: #{cross_attention_block.1} parent=11 // pred_check_branch
          %576 = sbr.rel (%p574) target = $region64
        $region63: #{cross_attention_block.1} parent=11 // pred_region
          %578 = vsyncadd [#allocation9], 0
          %s579 = sshll.u32 %s14, 4
          %s580 = int_to_ptr.hbm [resolvable:$true] %s579
          %s581 = sshll.u32 [#allocation8], 4
          %s582 = int_to_ptr.vmem [resolvable:$true] %s581
          %587 = dma.hbm_to_vmem [thread:$0]  %s580, 256, %s582, [#allocation9], 64, 64, 4
        $region64: #{cross_attention_block.1} parent=11 // pred_fallthru
          _
        // Predicated region
        $region65: #{cross_attention_block.1} parent=11 // pred_check
          %p588 = pneg %p396
        $region66: #{cross_attention_block.1} parent=11 // pred_check_branch
          %590 = sbr.rel (%p588) target = $region68
        $region67: #{cross_attention_block.1} parent=11 // pred_region
          %592 = vsyncadd [#allocation9], 0
          %s594 = sshll.u32 %s15, 4
          %s595 = int_to_ptr.hbm [resolvable:$true] %s594
          %s596 = sshll.u32 [#allocation10], 4
          %s597 = int_to_ptr.vmem [resolvable:$true] %s596
          %599 = dma.hbm_to_vmem [thread:$0]  %s595, 16, %s597, [#allocation9]
        $region68: #{cross_attention_block.1} parent=11 // pred_fallthru
          _
        // Predicated region
        $region69: #{cross_attention_block.1} parent=11 // pred_check
          %p600 = pneg %p417
        $region70: #{cross_attention_block.1} parent=11 // pred_check_branch
          %602 = sbr.rel (%p600) target = $region72
        $region71: #{cross_attention_block.1} parent=11 // pred_region
          _
        $region72: #{cross_attention_block.1} parent=11 // pred_fallthru
          _
        // Predicated region
        $region73: #{cross_attention_block.1} parent=11 // pred_check
          %p603 = pneg %p438
        $region74: #{cross_attention_block.1} parent=11 // pred_check_branch
          %605 = sbr.rel (%p603) target = $region76
        $region75: #{cross_attention_block.1} parent=11 // pred_region
          %607 = vsyncadd [#allocation12], 0
          %s609 = sshll.u32 %s17, 4
          %s610 = int_to_ptr.hbm [resolvable:$true] %s609
          %s611 = sshll.u32 [#allocation11], 4
          %s612 = int_to_ptr.vmem [resolvable:$true] %s611
          %614 = dma.hbm_to_vmem [thread:$0]  %s610, 16, %s612, [#allocation12]
        $region76: #{cross_attention_block.1} parent=11 // pred_fallthru
          _
      $region12: #{cross_attention_block.1} parent=5 // pred_fallthru
        _
      %p615 = scmp.lt.s32.totalorder %s36, 2
      // Predicated region
      $region77: #{cross_attention_block.1} parent=5 // pred_check
        %p616 = pneg %p615
      $region78: #{cross_attention_block.1} parent=5 // pred_check_branch
        %618 = sbr.rel (%p616) target = $region80
      $region79: #{cross_attention_block.1} parent=5 // pred_region
        // Predicated region
        $region81: #{cross_attention_block.1} parent=79 // pred_check
          %p619 = pneg %p70
        $region82: #{cross_attention_block.1} parent=79 // pred_check_branch
          %621 = sbr.rel (%p619) target = $region84
        $region83: #{cross_attention_block.1} parent=79 // pred_region
          %p622 = scmp.lt.s32.totalorder %s43, 1
          %s623 = scalar_select %p622, %s43, 1
          %p624 = scmp.lt.s32.totalorder %s44, 0
          %s625 = scalar_select %p624, %s44, 0
          %s626 = sadd.s32 %s625, %s623
          %s627 = smul.addr %s626, 8
          %s628 = scalar_lea.vmem %s0, %s627
        $region84: #{cross_attention_block.1} parent=79 // pred_fallthru
          _
        // Predicated region
        $region85: #{cross_attention_block.1} parent=79 // pred_check
          %p629 = pneg %p96
        $region86: #{cross_attention_block.1} parent=79 // pred_check_branch
          %631 = sbr.rel (%p629) target = $region88
        $region87: #{cross_attention_block.1} parent=79 // pred_region
          %p632 = scmp.lt.s32.totalorder %s43, 1
          %s633 = scalar_select %p632, %s43, 1
          %s634 = smul.addr %s633, 8
          %s635 = scalar_lea.vmem %s1, %s634
        $region88: #{cross_attention_block.1} parent=79 // pred_fallthru
          _
      $region80: #{cross_attention_block.1} parent=5 // pred_fallthru
        _
      %p636 = scmp.le.s32.totalorder 1, %s36
      %p637 = scmp.lt.s32.totalorder %s36, 3
      %p638 = pnand %p636, %p637
      %p639 = pneg %p638
      // Predicated region
      $region89: #{cross_attention_block.1} parent=5 // pred_check
        _
      $region90: #{cross_attention_block.1} parent=5 // pred_check_branch
        %641 = sbr.rel (%p638) target = $region92
      $region91: #{cross_attention_block.1} parent=5 // pred_region
        %s642 = ssub.s32 %s36, 1
        // Predicated region
        $region93: #{cross_attention_block.1} parent=91 // pred_check
          %p643 = pneg %p249
        $region94: #{cross_attention_block.1} parent=91 // pred_check_branch
          %645 = sbr.rel (%p643) target = $region96
        $region95: #{cross_attention_block.1} parent=91 // pred_region
          %647 = dma.done [#allocation3], 16
        $region96: #{cross_attention_block.1} parent=91 // pred_fallthru
          _
        // Predicated region
        $region97: #{cross_attention_block.1} parent=91 // pred_check
          %p648 = pneg %p291
        $region98: #{cross_attention_block.1} parent=91 // pred_check_branch
          %650 = sbr.rel (%p648) target = $region100
        $region99: #{cross_attention_block.1} parent=91 // pred_region
          %652 = dma.done [#allocation6], 256
        $region100: #{cross_attention_block.1} parent=91 // pred_fallthru
          _
        // Predicated region
        $region101: #{cross_attention_block.1} parent=91 // pred_check
          %p653 = pneg %p312
        $region102: #{cross_attention_block.1} parent=91 // pred_check_branch
          %655 = sbr.rel (%p653) target = $region104
        $region103: #{cross_attention_block.1} parent=91 // pred_region
          %657 = dma.done [#allocation6], 16
        $region104: #{cross_attention_block.1} parent=91 // pred_fallthru
          _
        // Predicated region
        $region105: #{cross_attention_block.1} parent=91 // pred_check
          %p658 = pneg %p375
        $region106: #{cross_attention_block.1} parent=91 // pred_check_branch
          %660 = sbr.rel (%p658) target = $region108
        $region107: #{cross_attention_block.1} parent=91 // pred_region
          %662 = dma.done [#allocation9], 256
        $region108: #{cross_attention_block.1} parent=91 // pred_fallthru
          _
        // Predicated region
        $region109: #{cross_attention_block.1} parent=91 // pred_check
          %p663 = pneg %p396
        $region110: #{cross_attention_block.1} parent=91 // pred_check_branch
          %665 = sbr.rel (%p663) target = $region112
        $region111: #{cross_attention_block.1} parent=91 // pred_region
          %667 = dma.done [#allocation9], 16
        $region112: #{cross_attention_block.1} parent=91 // pred_fallthru
          _
        // Predicated region
        $region113: #{cross_attention_block.1} parent=91 // pred_check
          %p668 = pneg %p438
        $region114: #{cross_attention_block.1} parent=91 // pred_check_branch
          %670 = sbr.rel (%p668) target = $region116
        $region115: #{cross_attention_block.1} parent=91 // pred_region
          %672 = dma.done [#allocation12], 16
        $region116: #{cross_attention_block.1} parent=91 // pred_fallthru
          _
        %p673 = scmp.lt.s32.totalorder %s45, 1
        %s674 = scalar_select %p673, %s45, 1
        %p675 = scmp.lt.s32.totalorder %s46, 0
        %s676 = scalar_select %p675, %s46, 0
        %s677 = sadd.s32 %s676, %s674
        %s678 = smul.addr %s677, 8
        %s679 = scalar_lea.vmem %s0, %s678
        %p680 = pneg %p76
        %p681 = pneg %p73
        %p682 = scmp.lt.s32.totalorder %s45, 1
        %s683 = scalar_select %p682, %s45, 1
        %s684 = smul.addr %s683, 8
        %s685 = scalar_lea.vmem %s1, %s684
        %p686 = pneg %p102
        %p687 = pneg %p99
        %p688 = pneg %p123
        %p689 = pneg %p120
        %p690 = pneg %p144
        %p691 = pneg %p141
        %p692 = pneg %p165
        %p693 = pneg %p162
        %p694 = pneg %p186
        %p695 = pneg %p183
        %p696 = pneg %p207
        %p697 = pneg %p204
        %p698 = pneg %p228
        %p699 = pneg %p225
        %p700 = pneg %p249
        %p701 = pneg %p246
        %p702 = pneg %p270
        %p703 = pneg %p267
        %p704 = pneg %p291
        %p705 = pneg %p288
        %p706 = pneg %p312
        %p707 = pneg %p309
        %p708 = pneg %p333
        %p709 = pneg %p330
        %p710 = pneg %p354
        %p711 = pneg %p351
        %p712 = pneg %p375
        %p713 = pneg %p372
        %p714 = pneg %p396
        %p715 = pneg %p393
        %p716 = pneg %p417
        %p717 = pneg %p414
        %p718 = pneg %p438
        %p719 = pneg %p435
        %p720 = pneg %p466
        %p721 = pneg %p463
        %s722 = sand.u32 %s453, 1
        %s723 = scalar_lea.sflag [#allocation4], %s722
        %s724 = sand.u32 %s453, 1
        %s725 = smul.addr %s724, 8
        %s726 = scalar_lea.vmem [#allocation13], %s725
        %p727 = pneg %p494
        %p728 = pneg %p491
        %s729 = sand.u32 %s481, 1
        %s730 = scalar_lea.sflag [#allocation15], %s729
        %s731 = sand.u32 %s481, 1
        %s732 = smul.addr %s731, 8
        %s733 = scalar_lea.vmem [#allocation14], %s732
        %p734 = scmp.lt.s32.totalorder %s45, 1
        %s735 = scalar_select %p734, %s45, 1
        %p736 = scmp.lt.s32.totalorder %s46, 0
        %s737 = scalar_select %p736, %s46, 0
        %s738 = sadd.s32 %s737, %s735
        %s739 = smul.addr %s738, 8
        %s740 = scalar_lea.vmem %s0, %s739
        %p741 = scmp.lt.s32.totalorder %s45, 1
        %s742 = scalar_select %p741, %s45, 1
        %s743 = smul.addr %s742, 8
        %s744 = scalar_lea.vmem %s1, %s743
        %v746 = vld [vmem:[%s740] sm:$0xff]
        %v747 = vld [vmem:[%s744] sm:$0xff]
        %v748 = vld [vmem:[%s2] sm:$0x1]
        %v749 = vld [vmem:[%s3] sm:$0x1]
        %vm750 = vcmask 261120
        %v751 = vsel %vm750, %v746, 0.0
        %752 = vadd.xlane.f32.xlu0 %v751
        %v753 = vpop.xlane.xlu0 %752
        %v754 = vrcp.pop 32.0
        %v755 = vmul.f32 32.0, %v754
        %v756 = vsub.f32 1.0, %v755
        %v757 = vmul.f32 %v754, %v756
        %v758 = vadd.f32 %v754, %v757
        %vm759 = vweird.f32 %v754
        %v760 = vsel %vm759, %v754, %v758
        %v761 = vmul.f32 %v753, %v760
        %v762 = vsub.f32 %v746, %v761
        %v763 = vmul.f32 %v762, %v762
        %v764 = vsel %vm750, %v763, 0.0
        %765 = vadd.xlane.f32.xlu0 %v764
        %v766 = vpop.xlane.xlu0 %765
        %v767 = vmul.f32 %v766, %v760
        %v768 = vadd.f32 %v767, 1e-05
        %v769 = vrsqrt.pop %v768
        %v770 = vmul.f32 %v769, %v768
        %v771 = vmul.f32 %v770, %v769
        %v772 = vmul.f32 0.5, %v771
        %v773 = vsub.f32 1.5, %v772
        %v774 = vmul.f32 %v769, %v773
        %vm775 = vweird.f32 %v768
        %vm776 = vweird.f32 %v769
        %vm777 = vmor %vm775, %vm776
        %v778 = vsel %vm777, %v769, %v774
        %v779 = vmul.f32 %v762, %v778
        %v781 = vperm.slane %v748, 0
        %v783 = vmul.f32 %v779, %v781
        %v785 = vperm.slane %v749, 0
        %v787 = vadd.f32 %v783, %v785
        %v788 = vpack.c.bf16 %v787, %v787
        %v789 = vld [vmem:[%s4] sm:$0xf]
        %v790 = vld [vmem:[%s4 + $0x4] sm:$0xf]
        %v791 = vld [vmem:[%s4 + $0x8] sm:$0xf]
        %v792 = vld [vmem:[%s4 + $0xc] sm:$0xf]
        %v793 = vld [vmem:[%s7] sm:$0x1]
        %v795 = vperm.slane %v793, 0
        %v801 = vunpack.c.l.b16 %v789
        %v802 = vunpack.c.l.b16 %v790
        %v803 = vunpack.c.l.b16 %v791
        %v804 = vunpack.c.l.b16 %v792
        %v805 = vpack.c.b16 %v802, %v801
        %v806 = vpack.c.b16 %v804, %v803
        %v810 = vsel %vm750, %v788, 0
        %812 = vmatpush.bf16.msra.mxu0 0
        %813 = vmatpush.bf16.msra.mxu0 0
        %814 = vmatpush.bf16.msra.mxu0 0
        %815 = vmatpush.bf16.msra.mxu0 0
        %816 = vmatpush.bf16.msra.mxu0 0
        %817 = vmatpush.bf16.msra.mxu0 0
        %818 = vmatpush.bf16.msra.mxu0 %v806
        %819 = vmatpush.bf16.msra.mxu0 %v805
        %820 = vmatmul.bf16.gmra.mxu0 %v810
        %v821 = vpop.f32.mrf.mxu0
        %v822 = vadd.f32 %v795, %v821
        %v823 = vpop.f32.mrf.mxu0
        %824 = vdwg.mxu0
        %v825 = vmul.f32 %v822, 0.35355338
        %v826 = vpack.c.bf16 %v747, %v747
        %v827 = vld [vmem:[%s5] sm:$0xf]
        %v828 = vld [vmem:[%s5 + $0x4] sm:$0xf]
        %v829 = vld [vmem:[%s5 + $0x8] sm:$0xf]
        %v830 = vld [vmem:[%s5 + $0xc] sm:$0xf]
        %v831 = vld [vmem:[#allocation2] sm:$0x1]
        %v833 = vperm.slane %v831, 0
        %v839 = vunpack.c.l.b16 %v827
        %v840 = vunpack.c.l.b16 %v828
        %v841 = vunpack.c.l.b16 %v829
        %v842 = vunpack.c.l.b16 %v830
        %v843 = vpack.c.b16 %v840, %v839
        %v844 = vpack.c.b16 %v842, %v841
        %v848 = vsel %vm750, %v826, 0
        %850 = vmatpush.bf16.msra.mxu0 0
        %851 = vmatpush.bf16.msra.mxu0 0
        %852 = vmatpush.bf16.msra.mxu0 0
        %853 = vmatpush.bf16.msra.mxu0 0
        %854 = vmatpush.bf16.msra.mxu0 0
        %855 = vmatpush.bf16.msra.mxu0 0
        %856 = vmatpush.bf16.msra.mxu0 %v844
        %857 = vmatpush.bf16.msra.mxu0 %v843
        %858 = vmatmul.bf16.gmra.mxu0 %v848
        %v859 = vpop.f32.mrf.mxu0
        %v860 = vadd.f32 %v833, %v859
        %v861 = vpop.f32.mrf.mxu0
        %862 = vdwg.mxu0
        %v863 = vld [vmem:[%s6] sm:$0xf]
        %v864 = vld [vmem:[%s6 + $0x4] sm:$0xf]
        %v865 = vld [vmem:[%s6 + $0x8] sm:$0xf]
        %v866 = vld [vmem:[%s6 + $0xc] sm:$0xf]
        %v867 = vld [vmem:[%s9] sm:$0x1]
        %v869 = vperm.slane %v867, 0
        %v875 = vunpack.c.l.b16 %v863
        %v876 = vunpack.c.l.b16 %v864
        %v877 = vunpack.c.l.b16 %v865
        %v878 = vunpack.c.l.b16 %v866
        %v879 = vpack.c.b16 %v876, %v875
        %v880 = vpack.c.b16 %v878, %v877
        %883 = vmatpush.bf16.msra.mxu0 0
        %884 = vmatpush.bf16.msra.mxu0 0
        %885 = vmatpush.bf16.msra.mxu0 0
        %886 = vmatpush.bf16.msra.mxu0 0
        %887 = vmatpush.bf16.msra.mxu0 0
        %888 = vmatpush.bf16.msra.mxu0 0
        %889 = vmatpush.bf16.msra.mxu0 %v880
        %890 = vmatpush.bf16.msra.mxu0 %v879
        %891 = vmatmul.bf16.gmra.mxu0 %v848
        %v892 = vpop.f32.mrf.mxu0
        %v893 = vadd.f32 %v869, %v892
        %v894 = vpop.f32.mrf.mxu0
        %895 = vdwg.mxu0
        %897 = vrot.lane.b32.xlu0 %v825, 120
        %v898 = vpop.permute.xlu0 %897
        %900 = vrot.lane.b32.xlu0 %v825, 112
        %v901 = vpop.permute.xlu0 %900
        %903 = vrot.lane.b32.xlu0 %v825, 104
        %v904 = vpop.permute.xlu0 %903
        %v906 = vrot.slane %v901, 4
        %vm907 = vcmask 1047556
        %v908 = vsel %vm907, %v906, %v825
        %v909 = vrot.slane %v825, 4
        %v910 = vsel %vm907, %v901, %v909
        %v912 = vunpack.c.l.s4 1983009808
        %v913 = vunpack.c.0.s8 %v912
        %v914 = vperm.slane %v908, %v913
        %v916 = vunpack.c.l.s4 1983009808
        %v917 = vunpack.c.0.s8 %v916
        %v918 = vperm.slane %v910, %v917
        %v919 = vrot.slane %v904, 4
        %v920 = vsel %vm907, %v919, %v898
        %v921 = vrot.slane %v898, 4
        %v922 = vsel %vm907, %v904, %v921
        %v924 = vunpack.c.l.s4 1983009808
        %v925 = vunpack.c.0.s8 %v924
        %v926 = vperm.slane %v920, %v925
        %v928 = vunpack.c.l.s4 1983009808
        %v929 = vunpack.c.0.s8 %v928
        %v930 = vperm.slane %v922, %v929
        %v931 = vrot.slane %v926, 4
        %v932 = vsel %vm907, %v931, %v914
        %v933 = vrot.slane %v914, 4
        %v934 = vsel %vm907, %v926, %v933
        %v936 = vunpack.c.l.s4 1934713408
        %v937 = vunpack.c.0.s8 %v936
        %v938 = vperm.slane %v932, %v937
        %v940 = vunpack.c.l.s4 1934713408
        %v941 = vunpack.c.0.s8 %v940
        %v942 = vperm.slane %v934, %v941
        %v943 = vrot.slane %v930, 4
        %v944 = vsel %vm907, %v943, %v918
        %v945 = vrot.slane %v918, 4
        %v946 = vsel %vm907, %v930, %v945
        %v948 = vunpack.c.l.s4 1934713408
        %v949 = vunpack.c.0.s8 %v948
        %v950 = vperm.slane %v944, %v949
        %v952 = vunpack.c.l.s4 1934713408
        %v953 = vunpack.c.0.s8 %v952
        %v954 = vperm.slane %v946, %v953
        %v955 = vrot.slane %v938, 4
        %v956 = vsel %vm907, 0.0, %v955
        %v957 = vrot.slane %v942, 4
        %v958 = vsel %vm907, 0.0, %v957
        %v959 = vrot.slane %v950, 4
        %v960 = vsel %vm907, 0.0, %v959
        %v961 = vrot.slane %v954, 4
        %v962 = vsel %vm907, 0.0, %v961
        %v963 = vsel %vm907, %v957, %v938
        %v965 = vunpack.c.l.s4 1983009808
        %v966 = vunpack.c.0.s8 %v965
        %v967 = vperm.slane %v963, %v966
        %v968 = vrot.slane %v958, 4
        %v969 = vsel %vm907, %v968, %v956
        %v971 = vunpack.c.l.s4 1983009808
        %v972 = vunpack.c.0.s8 %v971
        %v973 = vperm.slane %v969, %v972
        %v974 = vsel %vm907, %v961, %v950
        %v976 = vunpack.c.l.s4 1983009808
        %v977 = vunpack.c.0.s8 %v976
        %v978 = vperm.slane %v974, %v977
        %v979 = vrot.slane %v962, 4
        %v980 = vsel %vm907, %v979, %v960
        %v982 = vunpack.c.l.s4 1983009808
        %v983 = vunpack.c.0.s8 %v982
        %v984 = vperm.slane %v980, %v983
        %v985 = vrot.slane %v973, 4
        %v986 = vsel %vm907, %v985, %v967
        %v987 = vrot.slane %v967, 4
        %v988 = vsel %vm907, %v973, %v987
        %v990 = vunpack.c.l.s4 1934713408
        %v991 = vunpack.c.0.s8 %v990
        %v992 = vperm.slane %v986, %v991
        %v994 = vunpack.c.l.s4 1934713408
        %v995 = vunpack.c.0.s8 %v994
        %v996 = vperm.slane %v988, %v995
        %v997 = vrot.slane %v984, 4
        %v998 = vsel %vm907, %v997, %v978
        %v999 = vrot.slane %v978, 4
        %v1000 = vsel %vm907, %v984, %v999
        %v1002 = vunpack.c.l.s4 1934713408
        %v1003 = vunpack.c.0.s8 %v1002
        %v1004 = vperm.slane %v998, %v1003
        %v1006 = vunpack.c.l.s4 1934713408
        %v1007 = vunpack.c.0.s8 %v1006
        %v1008 = vperm.slane %v1000, %v1007
        %v1009 = vrot.slane %v1004, 4
        %v1010 = vsel %vm907, %v1009, %v992
        %v1011 = vrot.slane %v992, 4
        %v1012 = vsel %vm907, %v1004, %v1011
        %v1013 = vrot.slane %v1008, 4
        %v1014 = vsel %vm907, %v1013, %v996
        %v1015 = vrot.slane %v996, 4
        %v1016 = vsel %vm907, %v1008, %v1015
        %v1017 = vpack.c.bf16 %v1010, %v1010
        %v1018 = vpack.c.bf16 %v1012, %v1012
        %v1019 = vpack.c.bf16 %v1014, %v1014
        %v1020 = vpack.c.bf16 %v1016, %v1016
        %1022 = vrot.lane.b32.xlu0 %v860, 120
        %v1023 = vpop.permute.xlu0 %1022
        %1025 = vrot.lane.b32.xlu0 %v860, 112
        %v1026 = vpop.permute.xlu0 %1025
        %1028 = vrot.lane.b32.xlu0 %v860, 104
        %v1029 = vpop.permute.xlu0 %1028
        %v1031 = vrot.slane %v1026, 4
        %v1032 = vsel %vm907, %v1031, %v860
        %v1033 = vrot.slane %v860, 4
        %v1034 = vsel %vm907, %v1026, %v1033
        %v1036 = vunpack.c.l.s4 1983009808
        %v1037 = vunpack.c.0.s8 %v1036
        %v1038 = vperm.slane %v1032, %v1037
        %v1040 = vunpack.c.l.s4 1983009808
        %v1041 = vunpack.c.0.s8 %v1040
        %v1042 = vperm.slane %v1034, %v1041
        %v1043 = vrot.slane %v1029, 4
        %v1044 = vsel %vm907, %v1043, %v1023
        %v1045 = vrot.slane %v1023, 4
        %v1046 = vsel %vm907, %v1029, %v1045
        %v1048 = vunpack.c.l.s4 1983009808
        %v1049 = vunpack.c.0.s8 %v1048
        %v1050 = vperm.slane %v1044, %v1049
        %v1052 = vunpack.c.l.s4 1983009808
        %v1053 = vunpack.c.0.s8 %v1052
        %v1054 = vperm.slane %v1046, %v1053
        %v1055 = vrot.slane %v1050, 4
        %v1056 = vsel %vm907, %v1055, %v1038
        %v1057 = vrot.slane %v1038, 4
        %v1058 = vsel %vm907, %v1050, %v1057
        %v1060 = vunpack.c.l.s4 1934713408
        %v1061 = vunpack.c.0.s8 %v1060
        %v1062 = vperm.slane %v1056, %v1061
        %v1064 = vunpack.c.l.s4 1934713408
        %v1065 = vunpack.c.0.s8 %v1064
        %v1066 = vperm.slane %v1058, %v1065
        %v1067 = vrot.slane %v1054, 4
        %v1068 = vsel %vm907, %v1067, %v1042
        %v1069 = vrot.slane %v1042, 4
        %v1070 = vsel %vm907, %v1054, %v1069
        %v1072 = vunpack.c.l.s4 1934713408
        %v1073 = vunpack.c.0.s8 %v1072
        %v1074 = vperm.slane %v1068, %v1073
        %v1076 = vunpack.c.l.s4 1934713408
        %v1077 = vunpack.c.0.s8 %v1076
        %v1078 = vperm.slane %v1070, %v1077
        %v1079 = vrot.slane %v1062, 4
        %v1080 = vsel %vm907, 0.0, %v1079
        %v1081 = vrot.slane %v1066, 4
        %v1082 = vsel %vm907, 0.0, %v1081
        %v1083 = vrot.slane %v1074, 4
        %v1084 = vsel %vm907, 0.0, %v1083
        %v1085 = vrot.slane %v1078, 4
        %v1086 = vsel %vm907, 0.0, %v1085
        %v1087 = vsel %vm907, %v1081, %v1062
        %v1089 = vunpack.c.l.s4 1983009808
        %v1090 = vunpack.c.0.s8 %v1089
        %v1091 = vperm.slane %v1087, %v1090
        %v1092 = vrot.slane %v1082, 4
        %v1093 = vsel %vm907, %v1092, %v1080
        %v1095 = vunpack.c.l.s4 1983009808
        %v1096 = vunpack.c.0.s8 %v1095
        %v1097 = vperm.slane %v1093, %v1096
        %v1098 = vsel %vm907, %v1085, %v1074
        %v1100 = vunpack.c.l.s4 1983009808
        %v1101 = vunpack.c.0.s8 %v1100
        %v1102 = vperm.slane %v1098, %v1101
        %v1103 = vrot.slane %v1086, 4
        %v1104 = vsel %vm907, %v1103, %v1084
        %v1106 = vunpack.c.l.s4 1983009808
        %v1107 = vunpack.c.0.s8 %v1106
        %v1108 = vperm.slane %v1104, %v1107
        %v1109 = vrot.slane %v1097, 4
        %v1110 = vsel %vm907, %v1109, %v1091
        %v1111 = vrot.slane %v1091, 4
        %v1112 = vsel %vm907, %v1097, %v1111
        %v1114 = vunpack.c.l.s4 1934713408
        %v1115 = vunpack.c.0.s8 %v1114
        %v1116 = vperm.slane %v1110, %v1115
        %v1118 = vunpack.c.l.s4 1934713408
        %v1119 = vunpack.c.0.s8 %v1118
        %v1120 = vperm.slane %v1112, %v1119
        %v1121 = vrot.slane %v1108, 4
        %v1122 = vsel %vm907, %v1121, %v1102
        %v1123 = vrot.slane %v1102, 4
        %v1124 = vsel %vm907, %v1108, %v1123
        %v1126 = vunpack.c.l.s4 1934713408
        %v1127 = vunpack.c.0.s8 %v1126
        %v1128 = vperm.slane %v1122, %v1127
        %v1130 = vunpack.c.l.s4 1934713408
        %v1131 = vunpack.c.0.s8 %v1130
        %v1132 = vperm.slane %v1124, %v1131
        %v1133 = vrot.slane %v1128, 4
        %v1134 = vsel %vm907, %v1133, %v1116
        %v1135 = vrot.slane %v1116, 4
        %v1136 = vsel %vm907, %v1128, %v1135
        %v1137 = vrot.slane %v1132, 4
        %v1138 = vsel %vm907, %v1137, %v1120
        %v1139 = vrot.slane %v1120, 4
        %v1140 = vsel %vm907, %v1132, %v1139
        %v1141 = vpack.c.bf16 %v1134, %v1134
        %v1142 = vpack.c.bf16 %v1136, %v1136
        %v1143 = vpack.c.bf16 %v1138, %v1138
        %v1144 = vpack.c.bf16 %v1140, %v1140
        %1146 = vrot.lane.b32.xlu0 %v893, 120
        %v1147 = vpop.permute.xlu0 %1146
        %1149 = vrot.lane.b32.xlu0 %v893, 112
        %v1150 = vpop.permute.xlu0 %1149
        %1152 = vrot.lane.b32.xlu0 %v893, 104
        %v1153 = vpop.permute.xlu0 %1152
        %v1155 = vrot.slane %v1150, 4
        %v1156 = vsel %vm907, %v1155, %v893
        %v1157 = vrot.slane %v893, 4
        %v1158 = vsel %vm907, %v1150, %v1157
        %v1160 = vunpack.c.l.s4 1983009808
        %v1161 = vunpack.c.0.s8 %v1160
        %v1162 = vperm.slane %v1156, %v1161
        %v1164 = vunpack.c.l.s4 1983009808
        %v1165 = vunpack.c.0.s8 %v1164
        %v1166 = vperm.slane %v1158, %v1165
        %v1167 = vrot.slane %v1153, 4
        %v1168 = vsel %vm907, %v1167, %v1147
        %v1169 = vrot.slane %v1147, 4
        %v1170 = vsel %vm907, %v1153, %v1169
        %v1172 = vunpack.c.l.s4 1983009808
        %v1173 = vunpack.c.0.s8 %v1172
        %v1174 = vperm.slane %v1168, %v1173
        %v1176 = vunpack.c.l.s4 1983009808
        %v1177 = vunpack.c.0.s8 %v1176
        %v1178 = vperm.slane %v1170, %v1177
        %v1179 = vrot.slane %v1174, 4
        %v1180 = vsel %vm907, %v1179, %v1162
        %v1181 = vrot.slane %v1162, 4
        %v1182 = vsel %vm907, %v1174, %v1181
        %v1184 = vunpack.c.l.s4 1934713408
        %v1185 = vunpack.c.0.s8 %v1184
        %v1186 = vperm.slane %v1180, %v1185
        %v1188 = vunpack.c.l.s4 1934713408
        %v1189 = vunpack.c.0.s8 %v1188
        %v1190 = vperm.slane %v1182, %v1189
        %v1191 = vrot.slane %v1178, 4
        %v1192 = vsel %vm907, %v1191, %v1166
        %v1193 = vrot.slane %v1166, 4
        %v1194 = vsel %vm907, %v1178, %v1193
        %v1196 = vunpack.c.l.s4 1934713408
        %v1197 = vunpack.c.0.s8 %v1196
        %v1198 = vperm.slane %v1192, %v1197
        %v1200 = vunpack.c.l.s4 1934713408
        %v1201 = vunpack.c.0.s8 %v1200
        %v1202 = vperm.slane %v1194, %v1201
        %v1203 = vrot.slane %v1186, 4
        %v1204 = vsel %vm907, 0.0, %v1203
        %v1205 = vrot.slane %v1190, 4
        %v1206 = vsel %vm907, 0.0, %v1205
        %v1207 = vrot.slane %v1198, 4
        %v1208 = vsel %vm907, 0.0, %v1207
        %v1209 = vrot.slane %v1202, 4
        %v1210 = vsel %vm907, 0.0, %v1209
        %v1211 = vsel %vm907, %v1205, %v1186
        %v1213 = vunpack.c.l.s4 1983009808
        %v1214 = vunpack.c.0.s8 %v1213
        %v1215 = vperm.slane %v1211, %v1214
        %v1216 = vrot.slane %v1206, 4
        %v1217 = vsel %vm907, %v1216, %v1204
        %v1219 = vunpack.c.l.s4 1983009808
        %v1220 = vunpack.c.0.s8 %v1219
        %v1221 = vperm.slane %v1217, %v1220
        %v1222 = vsel %vm907, %v1209, %v1198
        %v1224 = vunpack.c.l.s4 1983009808
        %v1225 = vunpack.c.0.s8 %v1224
        %v1226 = vperm.slane %v1222, %v1225
        %v1227 = vrot.slane %v1210, 4
        %v1228 = vsel %vm907, %v1227, %v1208
        %v1230 = vunpack.c.l.s4 1983009808
        %v1231 = vunpack.c.0.s8 %v1230
        %v1232 = vperm.slane %v1228, %v1231
        %v1233 = vrot.slane %v1221, 4
        %v1234 = vsel %vm907, %v1233, %v1215
        %v1235 = vrot.slane %v1215, 4
        %v1236 = vsel %vm907, %v1221, %v1235
        %v1238 = vunpack.c.l.s4 1934713408
        %v1239 = vunpack.c.0.s8 %v1238
        %v1240 = vperm.slane %v1234, %v1239
        %v1242 = vunpack.c.l.s4 1934713408
        %v1243 = vunpack.c.0.s8 %v1242
        %v1244 = vperm.slane %v1236, %v1243
        %v1245 = vrot.slane %v1232, 4
        %v1246 = vsel %vm907, %v1245, %v1226
        %v1247 = vrot.slane %v1226, 4
        %v1248 = vsel %vm907, %v1232, %v1247
        %v1250 = vunpack.c.l.s4 1934713408
        %v1251 = vunpack.c.0.s8 %v1250
        %v1252 = vperm.slane %v1246, %v1251
        %v1254 = vunpack.c.l.s4 1934713408
        %v1255 = vunpack.c.0.s8 %v1254
        %v1256 = vperm.slane %v1248, %v1255
        %v1257 = vrot.slane %v1252, 4
        %v1258 = vsel %vm907, %v1257, %v1240
        %v1259 = vrot.slane %v1240, 4
        %v1260 = vsel %vm907, %v1252, %v1259
        %v1261 = vrot.slane %v1256, 4
        %v1262 = vsel %vm907, %v1261, %v1244
        %v1263 = vrot.slane %v1244, 4
        %v1264 = vsel %vm907, %v1256, %v1263
        %v1265 = vpack.c.bf16 %v1258, %v1258
        %v1266 = vpack.c.bf16 %v1260, %v1260
        %v1267 = vpack.c.bf16 %v1262, %v1262
        %v1268 = vpack.c.bf16 %v1264, %v1264
        %vm1269 = vcmask 64512
        %v1271 = vsel %vm1269, %v1017, 0
        %v1274 = vsel %vm1269, %v1141, 0
        %1276 = vmatpush.bf16.xpose.msra.mxu0 0
        %1277 = vmatpush.bf16.xpose.msra.mxu0 0
        %1278 = vmatpush.bf16.xpose.msra.mxu0 0
        %1279 = vmatpush.bf16.xpose.msra.mxu0 0
        %1280 = vmatpush.bf16.xpose.msra.mxu0 0
        %1281 = vmatpush.bf16.xpose.msra.mxu0 0
        %1282 = vmatpush.bf16.xpose.msra.mxu0 0
        %1283 = vmatpush.bf16.xpose.msra.mxu0 %v1274
        %1284 = vmatmul.bf16.gmra.mxu0 %v1271
        %v1285 = vpop.f32.mrf.mxu0
        %v1286 = vadd.f32 0.0, %v1285
        %v1287 = vpop.f32.mrf.mxu0
        %1288 = vdwg.mxu0
        %v1290 = vsel %vm1269, %v1018, 0
        %v1293 = vsel %vm1269, %v1142, 0
        %1295 = vmatpush.bf16.xpose.msra.mxu0 0
        %1296 = vmatpush.bf16.xpose.msra.mxu0 0
        %1297 = vmatpush.bf16.xpose.msra.mxu0 0
        %1298 = vmatpush.bf16.xpose.msra.mxu0 0
        %1299 = vmatpush.bf16.xpose.msra.mxu0 0
        %1300 = vmatpush.bf16.xpose.msra.mxu0 0
        %1301 = vmatpush.bf16.xpose.msra.mxu0 0
        %1302 = vmatpush.bf16.xpose.msra.mxu0 %v1293
        %1303 = vmatmul.bf16.gmra.mxu0 %v1290
        %v1304 = vpop.f32.mrf.mxu0
        %v1305 = vadd.f32 0.0, %v1304
        %v1306 = vpop.f32.mrf.mxu0
        %1307 = vdwg.mxu0
        %v1309 = vsel %vm1269, %v1019, 0
        %v1312 = vsel %vm1269, %v1143, 0
        %1314 = vmatpush.bf16.xpose.msra.mxu0 0
        %1315 = vmatpush.bf16.xpose.msra.mxu0 0
        %1316 = vmatpush.bf16.xpose.msra.mxu0 0
        %1317 = vmatpush.bf16.xpose.msra.mxu0 0
        %1318 = vmatpush.bf16.xpose.msra.mxu0 0
        %1319 = vmatpush.bf16.xpose.msra.mxu0 0
        %1320 = vmatpush.bf16.xpose.msra.mxu0 0
        %1321 = vmatpush.bf16.xpose.msra.mxu0 %v1312
        %1322 = vmatmul.bf16.gmra.mxu0 %v1309
        %v1323 = vpop.f32.mrf.mxu0
        %v1324 = vadd.f32 0.0, %v1323
        %v1325 = vpop.f32.mrf.mxu0
        %1326 = vdwg.mxu0
        %v1328 = vsel %vm1269, %v1020, 0
        %v1331 = vsel %vm1269, %v1144, 0
        %1333 = vmatpush.bf16.xpose.msra.mxu0 0
        %1334 = vmatpush.bf16.xpose.msra.mxu0 0
        %1335 = vmatpush.bf16.xpose.msra.mxu0 0
        %1336 = vmatpush.bf16.xpose.msra.mxu0 0
        %1337 = vmatpush.bf16.xpose.msra.mxu0 0
        %1338 = vmatpush.bf16.xpose.msra.mxu0 0
        %1339 = vmatpush.bf16.xpose.msra.mxu0 0
        %1340 = vmatpush.bf16.xpose.msra.mxu0 %v1331
        %1341 = vmatmul.bf16.gmra.mxu0 %v1328
        %v1342 = vpop.f32.mrf.mxu0
        %v1343 = vadd.f32 0.0, %v1342
        %v1344 = vpop.f32.mrf.mxu0
        %1345 = vdwg.mxu0
        %v1346 = vsel %vm1269, %v1286, -inf
        %1347 = vmax.xlane.f32.xlu0 %v1346
        %v1348 = vpop.xlane.xlu0 %1347
        %v1349 = vsel %vm1269, %v1305, -inf
        %1350 = vmax.xlane.f32.xlu0 %v1349
        %v1351 = vpop.xlane.xlu0 %1350
        %v1352 = vsel %vm1269, %v1324, -inf
        %1353 = vmax.xlane.f32.xlu0 %v1352
        %v1354 = vpop.xlane.xlu0 %1353
        %v1355 = vsel %vm1269, %v1343, -inf
        %1356 = vmax.xlane.f32.xlu0 %v1355
        %v1357 = vpop.xlane.xlu0 %1356
        %v1358 = vsub.f32 %v1286, %v1348
        %v1359 = vsub.f32 %v1305, %v1351
        %v1360 = vsub.f32 %v1324, %v1354
        %v1361 = vsub.f32 %v1343, %v1357
        %v1362 = vmul.f32 %v1358, 1.442695
        %v1363 = vpow.pop %v1362
        %v1364 = vmul.f32 %v1359, 1.442695
        %v1365 = vpow.pop %v1364
        %v1366 = vmul.f32 %v1360, 1.442695
        %v1367 = vpow.pop %v1366
        %v1368 = vmul.f32 %v1361, 1.442695
        %v1369 = vpow.pop %v1368
        %v1370 = vsel %vm1269, %v1363, 0.0
        %1371 = vadd.xlane.f32.xlu0 %v1370
        %v1372 = vpop.xlane.xlu0 %1371
        %v1373 = vsel %vm1269, %v1365, 0.0
        %1374 = vadd.xlane.f32.xlu0 %v1373
        %v1375 = vpop.xlane.xlu0 %1374
        %v1376 = vsel %vm1269, %v1367, 0.0
        %1377 = vadd.xlane.f32.xlu0 %v1376
        %v1378 = vpop.xlane.xlu0 %1377
        %v1379 = vsel %vm1269, %v1369, 0.0
        %1380 = vadd.xlane.f32.xlu0 %v1379
        %v1381 = vpop.xlane.xlu0 %1380
        %v1382 = vrcp.pop %v1372
        %v1383 = vmul.f32 %v1372, %v1382
        %v1384 = vsub.f32 1.0, %v1383
        %v1385 = vmul.f32 %v1382, %v1384
        %v1386 = vadd.f32 %v1382, %v1385
        %vm1387 = vweird.f32 %v1372
        %vm1388 = vweird.f32 %v1382
        %vm1389 = vmor %vm1387, %vm1388
        %v1390 = vsel %vm1389, %v1382, %v1386
        %v1391 = vand.u32 2147483647, %v1372
        %vm1392 = vcmp.eq.f32.partialorder %v1391, 8.507059e+37
        %v1393 = vand.u32 %v1372, 2147483648
        %v1394 = vor.u32 1.1754944e-38, %v1393
        %v1395 = vsel %vm1392, %v1394, %v1390
        %v1396 = vmul.f32 1.0, %v1395
        %v1397 = vrcp.pop %v1375
        %v1398 = vmul.f32 %v1375, %v1397
        %v1399 = vsub.f32 1.0, %v1398
        %v1400 = vmul.f32 %v1397, %v1399
        %v1401 = vadd.f32 %v1397, %v1400
        %vm1402 = vweird.f32 %v1375
        %vm1403 = vweird.f32 %v1397
        %vm1404 = vmor %vm1402, %vm1403
        %v1405 = vsel %vm1404, %v1397, %v1401
        %v1406 = vand.u32 2147483647, %v1375
        %vm1407 = vcmp.eq.f32.partialorder %v1406, 8.507059e+37
        %v1408 = vand.u32 %v1375, 2147483648
        %v1409 = vor.u32 1.1754944e-38, %v1408
        %v1410 = vsel %vm1407, %v1409, %v1405
        %v1411 = vmul.f32 1.0, %v1410
        %v1412 = vrcp.pop %v1378
        %v1413 = vmul.f32 %v1378, %v1412
        %v1414 = vsub.f32 1.0, %v1413
        %v1415 = vmul.f32 %v1412, %v1414
        %v1416 = vadd.f32 %v1412, %v1415
        %vm1417 = vweird.f32 %v1378
        %vm1418 = vweird.f32 %v1412
        %vm1419 = vmor %vm1417, %vm1418
        %v1420 = vsel %vm1419, %v1412, %v1416
        %v1421 = vand.u32 2147483647, %v1378
        %vm1422 = vcmp.eq.f32.partialorder %v1421, 8.507059e+37
        %v1423 = vand.u32 %v1378, 2147483648
        %v1424 = vor.u32 1.1754944e-38, %v1423
        %v1425 = vsel %vm1422, %v1424, %v1420
        %v1426 = vmul.f32 1.0, %v1425
        %v1427 = vrcp.pop %v1381
        %v1428 = vmul.f32 %v1381, %v1427
        %v1429 = vsub.f32 1.0, %v1428
        %v1430 = vmul.f32 %v1427, %v1429
        %v1431 = vadd.f32 %v1427, %v1430
        %vm1432 = vweird.f32 %v1381
        %vm1433 = vweird.f32 %v1427
        %vm1434 = vmor %vm1432, %vm1433
        %v1435 = vsel %vm1434, %v1427, %v1431
        %v1436 = vand.u32 2147483647, %v1381
        %vm1437 = vcmp.eq.f32.partialorder %v1436, 8.507059e+37
        %v1438 = vand.u32 %v1381, 2147483648
        %v1439 = vor.u32 1.1754944e-38, %v1438
        %v1440 = vsel %vm1437, %v1439, %v1435
        %v1441 = vmul.f32 1.0, %v1440
        %v1442 = vmul.f32 %v1363, %v1396
        %v1443 = vmul.f32 %v1365, %v1411
        %v1444 = vmul.f32 %v1367, %v1426
        %v1445 = vmul.f32 %v1369, %v1441
        %v1446 = vsel %vm1269, %v1442, 0.0
        %v1447 = vsel %vm1269, %v1443, 0.0
        %v1448 = vadd.f32 %v1446, %v1447
        %v1449 = vsel %vm1269, %v1444, 0.0
        %v1450 = vadd.f32 %v1448, %v1449
        %v1451 = vsel %vm1269, %v1445, 0.0
        %v1452 = vadd.f32 %v1450, %v1451
        %v1453 = vrcp.pop 4.0
        %v1454 = vmul.f32 4.0, %v1453
        %v1455 = vsub.f32 1.0, %v1454
        %v1456 = vmul.f32 %v1453, %v1455
        %v1457 = vadd.f32 %v1453, %v1456
        %vm1458 = vweird.f32 %v1453
        %v1459 = vsel %vm1458, %v1453, %v1457
        %v1460 = vmul.f32 %v1452, %v1459
        %v1461 = vsel %vm1269, %v1460, 0.0
        %1462 = vst [vmem:[%s733] sm:$0xff] %v1461
        %v1463 = vpack.c.bf16 %v1442, %v1442
        %v1464 = vpack.c.bf16 %v1443, %v1443
        %v1465 = vpack.c.bf16 %v1444, %v1444
        %v1466 = vpack.c.bf16 %v1445, %v1445
        %v1468 = vsel %vm1269, %v1463, 0
        %vm1470 = vcmask 1043456
        %v1472 = vsel %vm1470, %v1265, 0
        %1474 = vmatpush.bf16.msra.mxu0 0
        %1475 = vmatpush.bf16.msra.mxu0 0
        %1476 = vmatpush.bf16.msra.mxu0 0
        %1477 = vmatpush.bf16.msra.mxu0 0
        %1478 = vmatpush.bf16.msra.mxu0 0
        %1479 = vmatpush.bf16.msra.mxu0 0
        %1480 = vmatpush.bf16.msra.mxu0 0
        %1481 = vmatpush.bf16.msra.mxu0 %v1472
        %1482 = vmatmul.bf16.gmra.mxu0 %v1468
        %v1483 = vpop.f32.mrf.mxu0
        %v1484 = vadd.f32 0.0, %v1483
        %v1485 = vpop.f32.mrf.mxu0
        %1486 = vdwg.mxu0
        %v1488 = vsel %vm1269, %v1464, 0
        %v1491 = vsel %vm1470, %v1266, 0
        %1493 = vmatpush.bf16.msra.mxu0 0
        %1494 = vmatpush.bf16.msra.mxu0 0
        %1495 = vmatpush.bf16.msra.mxu0 0
        %1496 = vmatpush.bf16.msra.mxu0 0
        %1497 = vmatpush.bf16.msra.mxu0 0
        %1498 = vmatpush.bf16.msra.mxu0 0
        %1499 = vmatpush.bf16.msra.mxu0 0
        %1500 = vmatpush.bf16.msra.mxu0 %v1491
        %1501 = vmatmul.bf16.gmra.mxu0 %v1488
        %v1502 = vpop.f32.mrf.mxu0
        %v1503 = vadd.f32 0.0, %v1502
        %v1504 = vpop.f32.mrf.mxu0
        %1505 = vdwg.mxu0
        %v1507 = vsel %vm1269, %v1465, 0
        %v1510 = vsel %vm1470, %v1267, 0
        %1512 = vmatpush.bf16.msra.mxu0 0
        %1513 = vmatpush.bf16.msra.mxu0 0
        %1514 = vmatpush.bf16.msra.mxu0 0
        %1515 = vmatpush.bf16.msra.mxu0 0
        %1516 = vmatpush.bf16.msra.mxu0 0
        %1517 = vmatpush.bf16.msra.mxu0 0
        %1518 = vmatpush.bf16.msra.mxu0 0
        %1519 = vmatpush.bf16.msra.mxu0 %v1510
        %1520 = vmatmul.bf16.gmra.mxu0 %v1507
        %v1521 = vpop.f32.mrf.mxu0
        %v1522 = vadd.f32 0.0, %v1521
        %v1523 = vpop.f32.mrf.mxu0
        %1524 = vdwg.mxu0
        %v1526 = vsel %vm1269, %v1466, 0
        %v1529 = vsel %vm1470, %v1268, 0
        %1531 = vmatpush.bf16.msra.mxu0 0
        %1532 = vmatpush.bf16.msra.mxu0 0
        %1533 = vmatpush.bf16.msra.mxu0 0
        %1534 = vmatpush.bf16.msra.mxu0 0
        %1535 = vmatpush.bf16.msra.mxu0 0
        %1536 = vmatpush.bf16.msra.mxu0 0
        %1537 = vmatpush.bf16.msra.mxu0 0
        %1538 = vmatpush.bf16.msra.mxu0 %v1529
        %1539 = vmatmul.bf16.gmra.mxu0 %v1526
        %v1540 = vpop.f32.mrf.mxu0
        %v1541 = vadd.f32 0.0, %v1540
        %v1542 = vpop.f32.mrf.mxu0
        %1543 = vdwg.mxu0
        %v1544 = vrot.slane %v1522, 4
        %v1545 = vsel %vm907, %v1544, %v1484
        %v1546 = vrot.slane %v1484, 4
        %v1547 = vsel %vm907, %v1522, %v1546
        %v1549 = vunpack.c.l.s4 1983009808
        %v1550 = vunpack.c.0.s8 %v1549
        %v1551 = vperm.slane %v1545, %v1550
        %v1553 = vunpack.c.l.s4 1983009808
        %v1554 = vunpack.c.0.s8 %v1553
        %v1555 = vperm.slane %v1547, %v1554
        %v1556 = vrot.slane %v1541, 4
        %v1557 = vsel %vm907, %v1556, %v1503
        %v1558 = vrot.slane %v1503, 4
        %v1559 = vsel %vm907, %v1541, %v1558
        %v1561 = vunpack.c.l.s4 1983009808
        %v1562 = vunpack.c.0.s8 %v1561
        %v1563 = vperm.slane %v1557, %v1562
        %v1565 = vunpack.c.l.s4 1983009808
        %v1566 = vunpack.c.0.s8 %v1565
        %v1567 = vperm.slane %v1559, %v1566
        %v1568 = vrot.slane %v1563, 4
        %v1569 = vsel %vm907, %v1568, %v1551
        %v1570 = vrot.slane %v1551, 4
        %v1571 = vsel %vm907, %v1563, %v1570
        %v1573 = vunpack.c.l.s4 1934713408
        %v1574 = vunpack.c.0.s8 %v1573
        %v1575 = vperm.slane %v1569, %v1574
        %v1577 = vunpack.c.l.s4 1934713408
        %v1578 = vunpack.c.0.s8 %v1577
        %v1579 = vperm.slane %v1571, %v1578
        %v1580 = vrot.slane %v1567, 4
        %v1581 = vsel %vm907, %v1580, %v1555
        %v1582 = vrot.slane %v1555, 4
        %v1583 = vsel %vm907, %v1567, %v1582
        %v1585 = vunpack.c.l.s4 1934713408
        %v1586 = vunpack.c.0.s8 %v1585
        %v1587 = vperm.slane %v1581, %v1586
        %v1589 = vunpack.c.l.s4 1934713408
        %v1590 = vunpack.c.0.s8 %v1589
        %v1591 = vperm.slane %v1583, %v1590
        %v1592 = vrot.slane %v1575, 4
        %v1593 = vsel %vm907, 0.0, %v1592
        %v1594 = vrot.slane %v1579, 4
        %v1595 = vsel %vm907, 0.0, %v1594
        %v1596 = vrot.slane %v1587, 4
        %v1597 = vsel %vm907, 0.0, %v1596
        %v1598 = vrot.slane %v1591, 4
        %v1599 = vsel %vm907, 0.0, %v1598
        %v1600 = vsel %vm907, %v1594, %v1575
        %v1602 = vunpack.c.l.s4 1983009808
        %v1603 = vunpack.c.0.s8 %v1602
        %v1604 = vperm.slane %v1600, %v1603
        %v1605 = vrot.slane %v1595, 4
        %v1606 = vsel %vm907, %v1605, %v1593
        %v1608 = vunpack.c.l.s4 1983009808
        %v1609 = vunpack.c.0.s8 %v1608
        %v1610 = vperm.slane %v1606, %v1609
        %v1611 = vsel %vm907, %v1598, %v1587
        %v1613 = vunpack.c.l.s4 1983009808
        %v1614 = vunpack.c.0.s8 %v1613
        %v1615 = vperm.slane %v1611, %v1614
        %v1616 = vrot.slane %v1599, 4
        %v1617 = vsel %vm907, %v1616, %v1597
        %v1619 = vunpack.c.l.s4 1983009808
        %v1620 = vunpack.c.0.s8 %v1619
        %v1621 = vperm.slane %v1617, %v1620
        %v1622 = vrot.slane %v1610, 4
        %v1623 = vsel %vm907, %v1622, %v1604
        %v1624 = vrot.slane %v1604, 4
        %v1625 = vsel %vm907, %v1610, %v1624
        %v1627 = vunpack.c.l.s4 1934713408
        %v1628 = vunpack.c.0.s8 %v1627
        %v1629 = vperm.slane %v1623, %v1628
        %v1631 = vunpack.c.l.s4 1934713408
        %v1632 = vunpack.c.0.s8 %v1631
        %v1633 = vperm.slane %v1625, %v1632
        %v1634 = vrot.slane %v1621, 4
        %v1635 = vsel %vm907, %v1634, %v1615
        %v1636 = vrot.slane %v1615, 4
        %v1637 = vsel %vm907, %v1621, %v1636
        %v1639 = vunpack.c.l.s4 1934713408
        %v1640 = vunpack.c.0.s8 %v1639
        %v1641 = vperm.slane %v1635, %v1640
        %v1643 = vunpack.c.l.s4 1934713408
        %v1644 = vunpack.c.0.s8 %v1643
        %v1645 = vperm.slane %v1637, %v1644
        %v1646 = vrot.slane %v1641, 4
        %v1647 = vsel %vm907, %v1646, %v1629
        %v1648 = vrot.slane %v1629, 4
        %v1649 = vsel %vm907, %v1641, %v1648
        %v1650 = vrot.slane %v1645, 4
        %v1651 = vsel %vm907, %v1650, %v1633
        %v1652 = vrot.slane %v1633, 4
        %v1653 = vsel %vm907, %v1645, %v1652
        %1655 = vrot.lane.b32.xlu0 %v1649, 8
        %v1656 = vpop.permute.xlu0 %1655
        %1659 = vrot.lane.b32.xlu0 %v1651, 16
        %v1660 = vpop.permute.xlu0 %1659
        %1663 = vrot.lane.b32.xlu0 %v1653, 24
        %v1664 = vpop.permute.xlu0 %1663
        %v1666 = vsel %vm1269, %v1647, %v1656
        %vm1667 = vcmask 130048
        %v1668 = vsel %vm1667, %v1666, %v1660
        %vm1669 = vcmask 195584
        %v1670 = vsel %vm1669, %v1668, %v1664
        %v1671 = vpack.c.bf16 %v1670, %v1670
        %v1672 = vld [vmem:[#allocation5] sm:$0xf]
        %v1673 = vld [vmem:[#allocation5 + $0x4] sm:$0xf]
        %v1674 = vld [vmem:[#allocation5 + $0x8] sm:$0xf]
        %v1675 = vld [vmem:[#allocation5 + $0xc] sm:$0xf]
        %v1676 = vld [vmem:[#allocation7] sm:$0x1]
        %v1678 = vperm.slane %v1676, 0
        %v1684 = vunpack.c.l.b16 %v1672
        %v1685 = vunpack.c.l.b16 %v1673
        %v1686 = vunpack.c.l.b16 %v1674
        %v1687 = vunpack.c.l.b16 %v1675
        %v1688 = vpack.c.b16 %v1685, %v1684
        %v1689 = vpack.c.b16 %v1687, %v1686
        %v1693 = vsel %vm750, %v1671, 0
        %1695 = vmatpush.bf16.msra.mxu0 0
        %1696 = vmatpush.bf16.msra.mxu0 0
        %1697 = vmatpush.bf16.msra.mxu0 0
        %1698 = vmatpush.bf16.msra.mxu0 0
        %1699 = vmatpush.bf16.msra.mxu0 0
        %1700 = vmatpush.bf16.msra.mxu0 0
        %1701 = vmatpush.bf16.msra.mxu0 %v1689
        %1702 = vmatpush.bf16.msra.mxu0 %v1688
        %1703 = vmatmul.bf16.gmra.mxu0 %v1693
        %v1704 = vpop.f32.mrf.mxu0
        %v1705 = vadd.f32 %v1678, %v1704
        %v1706 = vpop.f32.mrf.mxu0
        %1707 = vdwg.mxu0
        %v1708 = vadd.f32 %v746, %v1705
        %v1709 = vld [vmem:[%s12] sm:$0x1]
        %v1710 = vld [vmem:[%s13] sm:$0x1]
        %v1711 = vsel %vm750, %v1708, 0.0
        %1712 = vadd.xlane.f32.xlu0 %v1711
        %v1713 = vpop.xlane.xlu0 %1712
        %v1714 = vmul.f32 %v1713, %v760
        %v1715 = vsub.f32 %v1708, %v1714
        %v1716 = vmul.f32 %v1715, %v1715
        %v1717 = vsel %vm750, %v1716, 0.0
        %1718 = vadd.xlane.f32.xlu0 %v1717
        %v1719 = vpop.xlane.xlu0 %1718
        %v1720 = vmul.f32 %v1719, %v760
        %v1721 = vadd.f32 %v1720, 1e-05
        %v1722 = vrsqrt.pop %v1721
        %v1723 = vmul.f32 %v1722, %v1721
        %v1724 = vmul.f32 %v1723, %v1722
        %v1725 = vmul.f32 0.5, %v1724
        %v1726 = vsub.f32 1.5, %v1725
        %v1727 = vmul.f32 %v1722, %v1726
        %vm1728 = vweird.f32 %v1721
        %vm1729 = vweird.f32 %v1722
        %vm1730 = vmor %vm1728, %vm1729
        %v1731 = vsel %vm1730, %v1722, %v1727
        %v1732 = vmul.f32 %v1715, %v1731
        %v1734 = vperm.slane %v1709, 0
        %v1736 = vmul.f32 %v1732, %v1734
        %v1738 = vperm.slane %v1710, 0
        %v1740 = vadd.f32 %v1736, %v1738
        %v1741 = vpack.c.bf16 %v1740, %v1740
        %v1742 = vld [vmem:[#allocation8] sm:$0xf]
        %v1743 = vld [vmem:[#allocation8 + $0x4] sm:$0xf]
        %v1744 = vld [vmem:[#allocation8 + $0x8] sm:$0xf]
        %v1745 = vld [vmem:[#allocation8 + $0xc] sm:$0xf]
        %v1746 = vld [vmem:[#allocation10] sm:$0x1]
        %v1748 = vperm.slane %v1746, 0
        %v1754 = vunpack.c.l.b16 %v1742
        %v1755 = vunpack.c.l.b16 %v1743
        %v1756 = vunpack.c.l.b16 %v1744
        %v1757 = vunpack.c.l.b16 %v1745
        %v1758 = vpack.c.b16 %v1755, %v1754
        %v1759 = vpack.c.b16 %v1757, %v1756
        %v1763 = vsel %vm750, %v1741, 0
        %1765 = vmatpush.bf16.msra.mxu0 0
        %1766 = vmatpush.bf16.msra.mxu0 0
        %1767 = vmatpush.bf16.msra.mxu0 0
        %1768 = vmatpush.bf16.msra.mxu0 0
        %1769 = vmatpush.bf16.msra.mxu0 0
        %1770 = vmatpush.bf16.msra.mxu0 0
        %1771 = vmatpush.bf16.msra.mxu0 %v1759
        %1772 = vmatpush.bf16.msra.mxu0 %v1758
        %1773 = vmatmul.bf16.gmra.mxu0 %v1763
        %v1774 = vpop.f32.mrf.mxu0
        %v1775 = vadd.f32 %v1748, %v1774
        %v1776 = vpop.f32.mrf.mxu0
        %1777 = vdwg.mxu0
        %v1778 = vmul.f32 %v1775, 0.5
        %v1779 = vmul.f32 %v1775, 0.70710677
        %v1780 = vmul.f32 %v1779, %v1779
        %v1781 = vmin.f32 16.0, %v1780
        %v1782 = vmul.f32 %v1781, 2.1237322e-06
        %v1783 = vadd.f32 %v1782, 0.00028619796
        %v1784 = vmul.f32 %v1781, %v1783
        %v1785 = vadd.f32 %v1784, 0.0036580483
        %v1786 = vmul.f32 %v1781, %v1785
        %v1787 = vadd.f32 %v1786, 0.05243302
        %v1788 = vmul.f32 %v1781, %v1787
        %v1789 = vadd.f32 %v1788, 0.18741608
        %v1790 = vmul.f32 %v1781, %v1789
        %v1791 = vadd.f32 %v1790, 1.1283791
        %v1792 = vmul.f32 %v1779, %v1791
        %v1793 = vmul.f32 %v1781, 3.8918573e-05
        %v1794 = vadd.f32 %v1793, 0.001143296
        %v1795 = vmul.f32 %v1781, %v1794
        %v1796 = vadd.f32 %v1795, 0.014752088
        %v1797 = vmul.f32 %v1781, %v1796
        %v1798 = vadd.f32 %v1797, 0.112945676
        %v1799 = vmul.f32 %v1781, %v1798
        %v1800 = vadd.f32 %v1799, 0.4994258
        %v1801 = vmul.f32 %v1781, %v1800
        %v1802 = vadd.f32 %v1801, 1.0
        %v1803 = vrcp.pop %v1802
        %v1804 = vmul.f32 %v1802, %v1803
        %v1805 = vsub.f32 1.0, %v1804
        %v1806 = vmul.f32 %v1803, %v1805
        %v1807 = vadd.f32 %v1803, %v1806
        %vm1808 = vweird.f32 %v1802
        %vm1809 = vweird.f32 %v1803
        %vm1810 = vmor %vm1808, %vm1809
        %v1811 = vsel %vm1810, %v1803, %v1807
        %v1812 = vand.u32 2147483647, %v1802
        %vm1813 = vcmp.eq.f32.partialorder %v1812, 8.507059e+37
        %v1814 = vand.u32 %v1802, 2147483648
        %v1815 = vor.u32 1.1754944e-38, %v1814
        %v1816 = vsel %vm1813, %v1815, %v1811
        %v1817 = vmul.f32 %v1792, %v1816
        %v1818 = vmin.f32 %v1817, 1.0
        %v1819 = vmax.f32 %v1818, -1.0
        %v1820 = vadd.f32 %v1819, 1.0
        %v1821 = vmul.f32 %v1778, %v1820
        %v1822 = vpack.c.bf16 %v1821, %v1821
        %v1823 = vld [vmem:[%s16] sm:$0xf]
        %v1824 = vld [vmem:[%s16 + $0x4] sm:$0xf]
        %v1825 = vld [vmem:[%s16 + $0x8] sm:$0xf]
        %v1826 = vld [vmem:[%s16 + $0xc] sm:$0xf]
        %v1827 = vld [vmem:[%s16 + $0x10] sm:$0xf]
        %v1828 = vld [vmem:[%s16 + $0x14] sm:$0xf]
        %v1829 = vld [vmem:[%s16 + $0x18] sm:$0xf]
        %v1830 = vld [vmem:[%s16 + $0x1c] sm:$0xf]
        %v1831 = vld [vmem:[%s16 + $0x20] sm:$0xf]
        %v1832 = vld [vmem:[%s16 + $0x24] sm:$0xf]
        %v1833 = vld [vmem:[%s16 + $0x28] sm:$0xf]
        %v1834 = vld [vmem:[%s16 + $0x2c] sm:$0xf]
        %v1835 = vld [vmem:[%s16 + $0x30] sm:$0xf]
        %v1836 = vld [vmem:[%s16 + $0x34] sm:$0xf]
        %v1837 = vld [vmem:[%s16 + $0x38] sm:$0xf]
        %v1838 = vld [vmem:[%s16 + $0x3c] sm:$0xf]
        %v1839 = vld [vmem:[#allocation11] sm:$0x1]
        %v1841 = vperm.slane %v1839, 0
        %v1859 = vunpack.c.l.b16 %v1823
        %v1860 = vunpack.c.l.b16 %v1824
        %v1861 = vunpack.c.l.b16 %v1825
        %v1862 = vunpack.c.l.b16 %v1826
        %v1863 = vunpack.c.l.b16 %v1827
        %v1864 = vunpack.c.l.b16 %v1828
        %v1865 = vunpack.c.l.b16 %v1829
        %v1866 = vunpack.c.l.b16 %v1830
        %v1867 = vunpack.c.l.b16 %v1831
        %v1868 = vunpack.c.l.b16 %v1832
        %v1869 = vunpack.c.l.b16 %v1833
        %v1870 = vunpack.c.l.b16 %v1834
        %v1871 = vunpack.c.l.b16 %v1835
        %v1872 = vunpack.c.l.b16 %v1836
        %v1873 = vunpack.c.l.b16 %v1837
        %v1874 = vunpack.c.l.b16 %v1838
        %v1875 = vpack.c.b16 %v1860, %v1859
        %v1876 = vpack.c.b16 %v1862, %v1861
        %v1877 = vpack.c.b16 %v1864, %v1863
        %v1878 = vpack.c.b16 %v1866, %v1865
        %v1879 = vpack.c.b16 %v1868, %v1867
        %v1880 = vpack.c.b16 %v1870, %v1869
        %v1881 = vpack.c.b16 %v1872, %v1871
        %v1882 = vpack.c.b16 %v1874, %v1873
        %1891 = vmatpush.bf16.msra.mxu0 %v1882
        %1892 = vmatpush.bf16.msra.mxu0 %v1881
        %1893 = vmatpush.bf16.msra.mxu0 %v1880
        %1894 = vmatpush.bf16.msra.mxu0 %v1879
        %1895 = vmatpush.bf16.msra.mxu0 %v1878
        %1896 = vmatpush.bf16.msra.mxu0 %v1877
        %1897 = vmatpush.bf16.msra.mxu0 %v1876
        %1898 = vmatpush.bf16.msra.mxu0 %v1875
        %1899 = vmatmul.bf16.gmra.mxu0 %v1822
        %v1900 = vpop.f32.mrf.mxu0
        %v1901 = vadd.f32 %v1841, %v1900
        %v1902 = vpop.f32.mrf.mxu0
        %1903 = vdwg.mxu0
        %v1904 = vadd.f32 %v1708, %v1901
        %1905 = vst.msk [vmem:[%s726] sm:$0xff] %vm750, %v1904
        %s1906 = sand.u32 %s453, 1
        %s1907 = scalar_lea.sflag [#allocation4], %s1906
        %s1908 = sand.u32 %s453, 1
        %s1909 = smul.addr %s1908, 8
        %s1910 = scalar_lea.vmem [#allocation13], %s1909
        %s1911 = sand.u32 %s481, 1
        %s1912 = scalar_lea.sflag [#allocation15], %s1911
        %s1913 = sand.u32 %s481, 1
        %s1914 = smul.addr %s1913, 8
        %s1915 = scalar_lea.vmem [#allocation14], %s1914
        // Predicated region
        $region117: #{cross_attention_block.1} parent=91 // pred_check
          %p1916 = pneg %p463
        $region118: #{cross_attention_block.1} parent=91 // pred_check_branch
          %1918 = sbr.rel (%p1916) target = $region120
        $region119: #{cross_attention_block.1} parent=91 // pred_region
          %1920 = vsyncadd %s1907, 0
          %s1921 = sadd.s32 %s46, %s45
          %s1922 = smul.addr %s1921, 8
          %s1923 = scalar_lea.hbm %s18, %s1922
          %s1925 = sshll.u32 %s1910, 4
          %s1926 = int_to_ptr.vmem [resolvable:$true] %s1925
          %s1927 = sshll.u32 %s1923, 4
          %s1928 = int_to_ptr.hbm [resolvable:$true] %s1927
          %1930 = dma.vmem_to_hbm [thread:$0]  %s1926, 128, %s1928, %s1907
        $region120: #{cross_attention_block.1} parent=91 // pred_fallthru
          _
        // Predicated region
        $region121: #{cross_attention_block.1} parent=91 // pred_check
          %p1931 = pneg %p491
        $region122: #{cross_attention_block.1} parent=91 // pred_check_branch
          %1933 = sbr.rel (%p1931) target = $region124
        $region123: #{cross_attention_block.1} parent=91 // pred_region
          %1935 = vsyncadd %s1912, 0
          %s1936 = sadd.s32 %s46, %s45
          %s1937 = smul.addr %s1936, 8
          %s1938 = scalar_lea.hbm %s19, %s1937
          %s1940 = sshll.u32 %s1915, 4
          %s1941 = int_to_ptr.vmem [resolvable:$true] %s1940
          %s1942 = sshll.u32 %s1938, 4
          %s1943 = int_to_ptr.hbm [resolvable:$true] %s1942
          %1945 = dma.vmem_to_hbm [thread:$0]  %s1941, 128, %s1943, %s1912
        $region124: #{cross_attention_block.1} parent=91 // pred_fallthru
          _
      $region92: #{cross_attention_block.1} parent=5 // pred_fallthru
        _
      %p1946 = scmp.le.s32.totalorder 2, %s36
      // Predicated region
      $region125: #{cross_attention_block.1} parent=5 // pred_check
        %p1947 = pneg %p1946
      $region126: #{cross_attention_block.1} parent=5 // pred_check_branch
        %1949 = sbr.rel (%p1947) target = $region128
      $region127: #{cross_attention_block.1} parent=5 // pred_region
        %s1950 = ssub.s32 %s36, 2
        // Predicated region
        $region129: #{cross_attention_block.1} parent=127 // pred_check
          %p1951 = pneg %p469
        $region130: #{cross_attention_block.1} parent=127 // pred_check_branch
          %1953 = sbr.rel (%p1951) target = $region132
        $region131: #{cross_attention_block.1} parent=127 // pred_region
          %s1954 = sand.u32 %s454, 1
          %s1955 = scalar_lea.sflag [#allocation4], %s1954
          %s1956 = sand.u32 %s454, 1
          %s1957 = smul.addr %s1956, 8
          %s1958 = scalar_lea.vmem [#allocation13], %s1957
          %1960 = dma.done %s1955, 128
        $region132: #{cross_attention_block.1} parent=127 // pred_fallthru
          _
        // Predicated region
        $region133: #{cross_attention_block.1} parent=127 // pred_check
          %p1961 = pneg %p497
        $region134: #{cross_attention_block.1} parent=127 // pred_check_branch
          %1963 = sbr.rel (%p1961) target = $region136
        $region135: #{cross_attention_block.1} parent=127 // pred_region
          %s1964 = sand.u32 %s482, 1
          %s1965 = scalar_lea.sflag [#allocation15], %s1964
          %s1966 = sand.u32 %s482, 1
          %s1967 = smul.addr %s1966, 8
          %s1968 = scalar_lea.vmem [#allocation14], %s1967
          %1970 = dma.done %s1965, 128
        $region136: #{cross_attention_block.1} parent=127 // pred_fallthru
          _
      $region128: #{cross_attention_block.1} parent=5 // pred_fallthru
        _
    $region6: #{cross_attention_block.1} parent=1 // loop_footer
      %s40 = sadd.s32 1, %s36
    $region7: #{cross_attention_block.1} parent=1 // loop_footer_branch
      %35 = sbr.rel target = $region3
    $region8: #{cross_attention_block.1} parent=1 // loop_exit
      _
    %1971 = vsyncpa [#allocation3], 1
    %s1972 = scalar_lea.sflag [#allocation3], 1
    %1973 = vsyncpa %s1972, 1
    %1974 = vsyncpa [#allocation6], 1
    %1975 = vsyncpa [#allocation9], 1
    %1976 = vsyncpa [#allocation12], 1
    %1977 = vsyncpa [#allocation4], 1
    %s1978 = scalar_lea.sflag [#allocation4], 1
    %1979 = vsyncpa %s1978, 1
    %1980 = vsyncpa [#allocation15], 1
    %s1981 = scalar_lea.sflag [#allocation15], 1
    %1982 = vsyncpa %s1981, 1

</llo_original>
